<compile_context>
chip_gen: v6e
topology: v6e:2x2x1
jax: 0.10.0
libtpu: 0.0.40
codegen_flags: <defaults>
</compile_context>

<pallas_src>
import functools
import math

import jax
import jax.numpy as jnp
from jax.experimental import pallas as pl
from jax.experimental.pallas import tpu as pltpu


def actor_kernel(x_ref, w1_ref, b1_ref, w2_ref, b2_ref, wh_ref, bh_ref, out_ref,
                 *, action_bound):
    # x: (Bb, D) f32       w1: (D, H) f32      b1: (1, H) f32
    # w2: (H, H) bf16      b2: (1, H) f32
    # wh: (2A, H) f32 (rows 0..A-1 = mu head, rows A..2A-1 = sigma head)
    # bh: (2A,) f32 in SMEM
    # out: (Bb, 2A) f32 (cols 0..A-1 = mu, cols A..2A-1 = sigma)
    x = x_ref[...]
    w1 = w1_ref[...]
    d = x.shape[1]

    # ---- Layer 1: K = input_dims is tiny (2); do it on the VPU instead of paying a
    #      near-empty MXU pass (K would pad to 128/256) and its result-FIFO drain.
    if d <= 8:
        acc = x[:, 0:1] * w1[0:1, :]
        for k in range(1, d):
            acc = acc + x[:, k:k + 1] * w1[k:k + 1, :]
    else:  # general fallback for larger input dims
        acc = jnp.dot(x, w1, preferred_element_type=jnp.float32)
    h1 = jnp.maximum(acc + b1_ref[...], 0.0)                      # (Bb, H) f32

    # ---- Layer 2: (Bb, H) @ (H, H) is the one real MXU shape.  bf16 operands
    #      (MXU-native on v5e/v6e/v7x), f32 accumulation via preferred_element_type.
    h2 = jnp.dot(h1.astype(w2_ref.dtype), w2_ref[...],
                 preferred_element_type=jnp.float32) + b2_ref[...]
    h2 = jnp.maximum(h2, 0.0)                                     # (Bb, H) f32

    # ---- Heads: N = n_actions (=1).  VPU multiply + lane-reduce (keepdims -> (Bb, 1)
    #      columns, no sublane->lane relayout), then one concatenated store.
    #      NOTE: if n_actions grows beyond ~4, replace this loop with a single MXU pass
    #      pre = h2 @ wh^T (padded-N) and apply tanh/softplus per column.
    two_a = wh_ref.shape[0]
    n_actions = two_a // 2
    cols = []
    for a in range(n_actions):                                    # mu columns
        mu_pre = jnp.sum(h2 * wh_ref[a:a + 1, :], axis=-1, keepdims=True) + bh_ref[a]
        cols.append(jnp.tanh(mu_pre) * action_bound)
    for a in range(n_actions):                                    # sigma columns
        j = n_actions + a
        sg_pre = jnp.sum(h2 * wh_ref[j:j + 1, :], axis=-1, keepdims=True) + bh_ref[j]
        # numerically-stable softplus(x) = max(x, 0) + log(1 + exp(-|x|))
        cols.append(jnp.maximum(sg_pre, 0.0)
                    + jnp.log(1.0 + jnp.exp(-jnp.abs(sg_pre)))
                    + 1e-8)
    out_ref[...] = jnp.concatenate(cols, axis=-1)                 # (Bb, 2A)


def _resident(shape):
    # Weights / trunk biases: same block every grid step -> stay VMEM-resident.
    return pl.BlockSpec(shape, lambda *_: (0,) * len(shape))


def _round_up(x, m):
    return -(-x // m) * m


def actor_forward(state, params, action_bound, block_b=None):
    """state: (B, D) f32.  Returns (mu, sigma), each (B, n_actions) f32."""
    w1_t, b1, w2_t, b2, w_mu, b_mu, w_sigma, b_sigma = params
    B, D = state.shape
    H = w1_t.shape[1]
    A = w_mu.shape[0]

    # Batch tiling: one block whenever possible (round B up to a lane-aligned 128 multiple),
    # capped at 2048 rows so activations stay well inside even v5e's 16 MiB scoped VMEM.
    MAX_BLOCK = 2048
    if block_b is None:
        block_b = min(_round_up(B, 128), MAX_BLOCK)
    n_blocks = -(-B // block_b)
    Bp = n_blocks * block_b
    if n_blocks > 1:
        assert block_b % 128 == 0, "multi-block tiling needs a lane-aligned batch tile"
    if Bp != B:
        state = jnp.pad(state, ((0, Bp - B), (0, 0)))

    # bf16 operands for the MXU matmul only; everything else stays f32.
    w2_bf16 = w2_t.astype(jnp.bfloat16)
    # Stack mu/sigma heads: one resident weight array, one SMEM bias array.
    w_heads = jnp.concatenate([w_mu, w_sigma], axis=0)            # (2A, H) f32
    b_heads = jnp.concatenate([b_mu, b_sigma], axis=0)            # (2A,)  f32

    kernel = functools.partial(actor_kernel, action_bound=float(action_bound))
    smem_scalar = pl.BlockSpec(memory_space=pltpu.MemorySpace.SMEM)

    out = pl.pallas_call(
        kernel,
        out_shape=jax.ShapeDtypeStruct((Bp, 2 * A), jnp.float32),
        grid=(n_blocks,),
        in_specs=[
            pl.BlockSpec((block_b, D), lambda i: (i, 0)),   # state, tiled over batch
            _resident((D, H)),                              # w1 (pre-transposed, f32)
            _resident((1, H)),                              # b1
            _resident((H, H)),                              # w2 (pre-transposed, bf16)
            _resident((1, H)),                              # b2
            _resident((2 * A, H)),                          # stacked head weights
            smem_scalar,                                    # stacked head biases (2A,)
        ],
        out_specs=pl.BlockSpec((block_b, 2 * A), lambda i: (i, 0)),
        compiler_params=pltpu.CompilerParams(
            # Usually a single block; only matters for B > 2048 multi-block runs.
            dimension_semantics=("parallel",),
        ),
    )(state, w1_t, b1, w2_bf16, b2, w_heads, b_heads)

    mu = out[:B, :A]          # (B, A)
    sigma = out[:B, A:]       # (B, A)
    return mu, sigma


def orthogonal_init(key, shape, gain):
    """Matches torch.nn.init.orthogonal_ semantics for a 2-D weight."""
    rows, cols = shape
    flat = (rows, cols) if rows >= cols else (cols, rows)
    a = jax.random.normal(key, flat, dtype=jnp.float32)
    q, r = jnp.linalg.qr(a)
    d = jnp.sign(jnp.diagonal(r))
    q = q * d[None, :]
    if rows < cols:
        q = q.T
    return gain * q[:rows, :cols]


def make_params(input_dims=2, n_actions=1, fc_dims=256, seed=0):
    k1, k2, k3, k4 = jax.random.split(jax.random.PRNGKey(seed), 4)
    relu_gain = math.sqrt(2.0)                                   # calculate_gain('relu')
    # PyTorch Linear weight layout is (out, in); init there, pre-transpose trunk weights
    # to (in, out) so the kernel does x @ W.  Head weights stay (A, H) rows.
    w1 = orthogonal_init(k1, (fc_dims, input_dims), relu_gain)   # (H, D)
    w2 = orthogonal_init(k2, (fc_dims, fc_dims), relu_gain)      # (H, H)
    w_mu = orthogonal_init(k3, (n_actions, fc_dims), 0.01)       # (A, H)
    w_sigma = orthogonal_init(k4, (n_actions, fc_dims), 0.01)    # (A, H)
    b1 = jnp.zeros((1, fc_dims), jnp.float32)
    b2 = jnp.zeros((1, fc_dims), jnp.float32)
    b_mu = jnp.zeros((n_actions,), jnp.float32)
    b_sigma = jnp.zeros((n_actions,), jnp.float32)
    return (w1.T, b1, w2.T, b2, w_mu, b_mu, w_sigma, b_sigma)


def reference_forward(state, params, action_bound):
    w1_t, b1, w2_t, b2, w_mu, b_mu, w_sigma, b_sigma = params
    hp = "highest"
    h1 = jnp.maximum(jnp.dot(state, w1_t, precision=hp) + b1, 0.0)
    h2 = jnp.maximum(jnp.dot(h1, w2_t, precision=hp) + b2, 0.0)
    mu = jnp.tanh(jnp.dot(h2, w_mu.T, precision=hp) + b_mu) * action_bound
    sigma = jax.nn.softplus(jnp.dot(h2, w_sigma.T, precision=hp) + b_sigma) + 1e-8
    return mu, sigma


if __name__ == "__main__":
    input_dims = 2        # MountainCarContinuous observation dim
    n_actions = 1         # single continuous action
    fc_dims = 256
    action_bound = 1.0    # action space is [-1, 1]
    batch = 256           # rollout batch -> one 256-row block, single grid step

    params = make_params(input_dims, n_actions, fc_dims, seed=0)
    state = jax.random.normal(jax.random.PRNGKey(0), (batch, input_dims), jnp.float32)

    mu, sigma = actor_forward(state, params, action_bound)       # default block_b = 256
    mu, sigma = jax.block_until_ready((mu, sigma))

    mu_ref, sigma_ref = reference_forward(state, params, action_bound)
    assert mu.shape == (batch, n_actions) and sigma.shape == (batch, n_actions)
    # Tolerance relaxed: the hidden matmul uses bf16 operands (f32 accumulation) while the
    # reference runs precision='highest' f32.
    assert jnp.allclose(mu, mu_ref, atol=2e-3, rtol=2e-3), "mu mismatch vs reference"
    assert jnp.allclose(sigma, sigma_ref, atol=2e-3, rtol=2e-3), "sigma mismatch vs reference"

    print("KERNEL_OK")
</pallas_src>

<mosaic_0001>
module attributes {stable_mosaic.version = 11 : i64} {
  func.func @actor_kernel(%arg0: i32, %arg1: memref<256x2xf32, #tpu.memory_space<vmem>>, %arg2: memref<2x256xf32, #tpu.memory_space<vmem>>, %arg3: memref<1x256xf32, #tpu.memory_space<vmem>>, %arg4: memref<256x256xbf16, #tpu.memory_space<vmem>>, %arg5: memref<1x256xf32, #tpu.memory_space<vmem>>, %arg6: memref<2x256xf32, #tpu.memory_space<vmem>>, %arg7: memref<2xf32, #tpu.memory_space<smem>>, %arg8: memref<256x2xf32, #tpu.memory_space<vmem>>) attributes {dimension_semantics = [#tpu.dimension_semantics<parallel>], iteration_bounds = array<i64: 1>, scalar_prefetch = 0 : i64, scratch_operands = 0 : i64, tpu.core_type = #tpu.core_type<tc>, window_params = [{transform_indices = @transform_0, window_bounds = array<i64: 256, 2>}, {pipeline_mode = #tpu.pipeline_mode<synchronous>, transform_indices = @transform_1, window_bounds = array<i64: 2, 256>}, {pipeline_mode = #tpu.pipeline_mode<synchronous>, transform_indices = @transform_2, window_bounds = array<i64: 1, 256>}, {pipeline_mode = #tpu.pipeline_mode<synchronous>, transform_indices = @transform_3, window_bounds = array<i64: 256, 256>}, {pipeline_mode = #tpu.pipeline_mode<synchronous>, transform_indices = @transform_4, window_bounds = array<i64: 1, 256>}, {pipeline_mode = #tpu.pipeline_mode<synchronous>, transform_indices = @transform_5, window_bounds = array<i64: 2, 256>}, {transform_indices = @transform_6, window_bounds = array<i64: 2>}, {transform_indices = @transform_7, window_bounds = array<i64: 256, 2>}]} {
    %c0 = arith.constant 0 : index
    %c0_0 = arith.constant 0 : index
    %0 = vector.load %arg1[%c0, %c0_0] : memref<256x2xf32, #tpu.memory_space<vmem>>, vector<256x2xf32>
    %c0_1 = arith.constant 0 : index
    %c0_2 = arith.constant 0 : index
    %1 = vector.load %arg2[%c0_1, %c0_2] : memref<2x256xf32, #tpu.memory_space<vmem>>, vector<2x256xf32>
    %2 = vector.extract_strided_slice %0 {offsets = [0, 0], sizes = [256, 1], strides = [1, 1]} : vector<256x2xf32> to vector<256x1xf32>
    %3 = vector.extract_strided_slice %1 {offsets = [0, 0], sizes = [1, 256], strides = [1, 1]} : vector<2x256xf32> to vector<1x256xf32>
    %4 = vector.broadcast %2 : vector<256x1xf32> to vector<256x256xf32>
    %5 = vector.broadcast %3 : vector<1x256xf32> to vector<256x256xf32>
    %6 = arith.mulf %4, %5 : vector<256x256xf32>
    %7 = vector.extract_strided_slice %0 {offsets = [0, 1], sizes = [256, 1], strides = [1, 1]} : vector<256x2xf32> to vector<256x1xf32>
    %8 = vector.extract_strided_slice %1 {offsets = [1, 0], sizes = [1, 256], strides = [1, 1]} : vector<2x256xf32> to vector<1x256xf32>
    %9 = vector.broadcast %7 : vector<256x1xf32> to vector<256x256xf32>
    %10 = vector.broadcast %8 : vector<1x256xf32> to vector<256x256xf32>
    %11 = arith.mulf %9, %10 : vector<256x256xf32>
    %12 = arith.addf %6, %11 : vector<256x256xf32>
    %c0_3 = arith.constant 0 : index
    %c0_4 = arith.constant 0 : index
    %13 = vector.load %arg3[%c0_3, %c0_4] : memref<1x256xf32, #tpu.memory_space<vmem>>, vector<1x256xf32>
    %14 = vector.broadcast %13 : vector<1x256xf32> to vector<256x256xf32>
    %15 = arith.addf %12, %14 : vector<256x256xf32>
    %cst = arith.constant 0.000000e+00 : f32
    %16 = vector.broadcast %cst : f32 to vector<256x256xf32>
    %17 = arith.maximumf %15, %16 : vector<256x256xf32>
    %18 = arith.truncf %17 : vector<256x256xf32> to vector<256x256xbf16>
    %c0_5 = arith.constant 0 : index
    %c0_6 = arith.constant 0 : index
    %19 = vector.load %arg4[%c0_5, %c0_6] : memref<256x256xbf16, #tpu.memory_space<vmem>>, vector<256x256xbf16>
    %cst_7 = arith.constant dense<0.000000e+00> : vector<256x256xf32>
    %20 = tpu.matmul %18, %19, %cst_7 {dimension_numbers = #tpu.dot_dimension_numbers<[1], [0], [0], [1], [0, 0, 1, 1], [], []>} : vector<256x256xbf16>, vector<256x256xbf16>, vector<256x256xf32> -> vector<256x256xf32>
    %c0_8 = arith.constant 0 : index
    %c0_9 = arith.constant 0 : index
    %21 = vector.load %arg5[%c0_8, %c0_9] : memref<1x256xf32, #tpu.memory_space<vmem>>, vector<1x256xf32>
    %22 = vector.broadcast %21 : vector<1x256xf32> to vector<256x256xf32>
    %23 = arith.addf %20, %22 : vector<256x256xf32>
    %cst_10 = arith.constant 0.000000e+00 : f32
    %24 = vector.broadcast %cst_10 : f32 to vector<256x256xf32>
    %25 = arith.maximumf %23, %24 : vector<256x256xf32>
    %c0_11 = arith.constant 0 : index
    %c0_12 = arith.constant 0 : index
    %26 = vector.load %arg6[%c0_11, %c0_12] : memref<2x256xf32, #tpu.memory_space<vmem>>, vector<1x256xf32>
    %27 = vector.broadcast %26 : vector<1x256xf32> to vector<256x256xf32>
    %28 = arith.mulf %25, %27 : vector<256x256xf32>
    %cst_13 = arith.constant dense<0.000000e+00> : vector<256xf32>
    %29 = vector.multi_reduction <add>, %28, %cst_13 [1] : vector<256x256xf32> to vector<256xf32>
    %30 = vector.shape_cast %29 : vector<256xf32> to vector<256x1xf32>
    %c0_14 = arith.constant 0 : index
    %31 = memref.load %arg7[%c0_14] : memref<2xf32, #tpu.memory_space<smem>>
    %32 = vector.broadcast %31 : f32 to vector<256x1xf32>
    %33 = arith.addf %30, %32 : vector<256x1xf32>
    %34 = math.tanh %33 : vector<256x1xf32>
    %cst_15 = arith.constant 1.000000e+00 : f32
    %35 = vector.broadcast %cst_15 : f32 to vector<256x1xf32>
    %36 = arith.mulf %34, %35 : vector<256x1xf32>
    %c1 = arith.constant 1 : index
    %c0_16 = arith.constant 0 : index
    %37 = vector.load %arg6[%c1, %c0_16] : memref<2x256xf32, #tpu.memory_space<vmem>>, vector<1x256xf32>
    %38 = vector.broadcast %37 : vector<1x256xf32> to vector<256x256xf32>
    %39 = arith.mulf %25, %38 : vector<256x256xf32>
    %cst_17 = arith.constant dense<0.000000e+00> : vector<256xf32>
    %40 = vector.multi_reduction <add>, %39, %cst_17 [1] : vector<256x256xf32> to vector<256xf32>
    %41 = vector.shape_cast %40 : vector<256xf32> to vector<256x1xf32>
    %c1_18 = arith.constant 1 : index
    %42 = memref.load %arg7[%c1_18] : memref<2xf32, #tpu.memory_space<smem>>
    %43 = vector.broadcast %42 : f32 to vector<256x1xf32>
    %44 = arith.addf %41, %43 : vector<256x1xf32>
    %cst_19 = arith.constant 0.000000e+00 : f32
    %45 = vector.broadcast %cst_19 : f32 to vector<256x1xf32>
    %46 = arith.maximumf %44, %45 : vector<256x1xf32>
    %47 = math.absf %44 : vector<256x1xf32>
    %cst_20 = arith.constant 0.000000e+00 : f32
    %48 = vector.broadcast %cst_20 : f32 to vector<256x1xf32>
    %49 = arith.subf %48, %47 : vector<256x1xf32>
    %50 = math.exp %49 : vector<256x1xf32>
    %cst_21 = arith.constant 1.000000e+00 : f32
    %51 = vector.broadcast %cst_21 : f32 to vector<256x1xf32>
    %52 = arith.addf %51, %50 : vector<256x1xf32>
    %53 = math.log %52 : vector<256x1xf32>
    %54 = arith.addf %46, %53 : vector<256x1xf32>
    %cst_22 = arith.constant 9.99999993E-9 : f32
    %55 = vector.broadcast %cst_22 : f32 to vector<256x1xf32>
    %56 = arith.addf %54, %55 : vector<256x1xf32>
    %57 = tpu.concatenate %36, %56 in 1 : vector<256x1xf32>, vector<256x1xf32> -> vector<256x2xf32>
    %c0_23 = arith.constant 0 : index
    %c0_24 = arith.constant 0 : index
    %58 = vector.load %arg8[%c0_23, %c0_24] : memref<256x2xf32, #tpu.memory_space<vmem>>, vector<256x2xf32>
    tpu.vector_store %arg8[%c0_23, %c0_24], %57 {strides = array<i32>} : memref<256x2xf32, #tpu.memory_space<vmem>>, vector<256x2xf32>,
    return
  }
  func.func @transform_0(%arg0: i32) -> (i32, i32) {
    %c0_i32 = arith.constant 0 : i32
    %c0_i32_0 = arith.constant 0 : i32
    return %arg0, %c0_i32 : i32, i32
  }
  func.func @transform_1(%arg0: i32) -> (i32, i32) {
    %c0_i32 = arith.constant 0 : i32
    %c0_i32_0 = arith.constant 0 : i32
    %c0_i32_1 = arith.constant 0 : i32
    return %c0_i32, %c0_i32_0 : i32, i32
  }
  func.func @transform_2(%arg0: i32) -> (i32, i32) {
    %c0_i32 = arith.constant 0 : i32
    %c0_i32_0 = arith.constant 0 : i32
    %c0_i32_1 = arith.constant 0 : i32
    return %c0_i32, %c0_i32_0 : i32, i32
  }
  func.func @transform_3(%arg0: i32) -> (i32, i32) {
    %c0_i32 = arith.constant 0 : i32
    %c0_i32_0 = arith.constant 0 : i32
    %c0_i32_1 = arith.constant 0 : i32
    return %c0_i32, %c0_i32_0 : i32, i32
  }
  func.func @transform_4(%arg0: i32) -> (i32, i32) {
    %c0_i32 = arith.constant 0 : i32
    %c0_i32_0 = arith.constant 0 : i32
    %c0_i32_1 = arith.constant 0 : i32
    return %c0_i32, %c0_i32_0 : i32, i32
  }
  func.func @transform_5(%arg0: i32) -> (i32, i32) {
    %c0_i32 = arith.constant 0 : i32
    %c0_i32_0 = arith.constant 0 : i32
    %c0_i32_1 = arith.constant 0 : i32
    return %c0_i32, %c0_i32_0 : i32, i32
  }
  func.func @transform_6(%arg0: i32) -> i32 {
    %c0_i32 = arith.constant 0 : i32
    %c0_i32_0 = arith.constant 0 : i32
    return %c0_i32 : i32
  }
  func.func @transform_7(%arg0: i32) -> (i32, i32) {
    %c0_i32 = arith.constant 0 : i32
    %c0_i32_0 = arith.constant 0 : i32
    return %arg0, %c0_i32 : i32, i32
  }
}

</mosaic_0001>

<llo_original>
// kernel: tpu_custom_call.1
$region0: #{tpu_custom_call.1}
  #allocation0 [shape = 'u32[]', space=smem, size = 0x4, offset = 0x4, fixed_abs, tag = 'smem constant byte address 0x4 - core index']
  #allocation1 [shape = 'u32[144,128]{1,0:T(1,128)}', space=vmem, size = 0x12000, scoped, tag = 'internal scratch']
  %s0 = inlined_call_operand.vmem [shape: f32[256,2], index: 0, kind: input, shape index: {}]
  %s1 = inlined_call_operand.vmem [shape: f32[2,256], index: 1, kind: input, shape index: {}]
  %s2 = inlined_call_operand.hbm [shape: f32[1,256], index: 2, kind: input, shape index: {}]
  %s3 = inlined_call_operand.vmem [shape: bf16[256,256], index: 3, kind: input, shape index: {}]
  %s4 = inlined_call_operand.vmem [shape: f32[1,256], index: 4, kind: input, shape index: {}]
  %s5 = inlined_call_operand.vmem [shape: f32[2,256], index: 5, kind: input, shape index: {}]
  %s6 = inlined_call_operand.vmem [shape: f32[2], index: 6, kind: input, shape index: {}]
  %s7 = inlined_call_operand.vmem [shape: f32[256,2], index: 7, kind: output, shape index: {}]
  %s8 = sld [smem:[#allocation0]]
  $region46: #{tpu_custom_call.1} parent=0
    _
  %s10 = ssub.s32 1, %s8
  %s11 = scalar_select 0, %s10, %s8
  $region1: #{tpu_custom_call.1} parent=0
    #allocation2 [shape = 'u8[1024]{0}', space=vmem, size = 0x400, scoped, tag = 'input window, operand 2, single buffered']
    #allocation3 [shape = 's32[1]{0}', space=sflag, size = 0x4, scoped, tag = 'scoped memory for tpu_custom_call.1']
    #allocation4 [shape = 's32[1]{0}', space=sflag, size = 0x4, scoped, tag = 'scoped memory for tpu_custom_call.1']
    #allocation5 [shape = 'u8[512]{0}', space=smem, size = 0x200, scoped, tag = 'input window, operand 6, single buffered']
    %12 = vsyncpa [#allocation3], 0
    %13 = vsyncpa [#allocation4], 0
    // Predicated region
    $region2: #{tpu_custom_call.1} parent=1 // pred_check
      _
    $region3: #{tpu_custom_call.1} parent=1 // pred_check_branch
      %15 = sbr.rel (0) target = $region5
    $region4: #{tpu_custom_call.1} parent=1 // pred_region
      _
    $region5: #{tpu_custom_call.1} parent=1 // pred_fallthru
      _
    // Predicated region
    $region6: #{tpu_custom_call.1} parent=1 // pred_check
      _
    $region7: #{tpu_custom_call.1} parent=1 // pred_check_branch
      %17 = sbr.rel (0) target = $region9
    $region8: #{tpu_custom_call.1} parent=1 // pred_region
      _
    $region9: #{tpu_custom_call.1} parent=1 // pred_fallthru
      _
    // Predicated region
    $region10: #{tpu_custom_call.1} parent=1 // pred_check
      _
    $region11: #{tpu_custom_call.1} parent=1 // pred_check_branch
      %19 = sbr.rel (0) target = $region13
    $region12: #{tpu_custom_call.1} parent=1 // pred_region
      %s21 = ssub.s32 32, 32
      %22 = vsyncadd [#allocation3], %s21
      %s24 = sshll.u32 [#allocation2], 4
      %s25 = int_to_ptr.vmem [resolvable:$true] %s24
      %27 = dma.hbm_to_vmem [thread:$0]  %s2, 32, %s25, [#allocation3]
    $region13: #{tpu_custom_call.1} parent=1 // pred_fallthru
      _
    // Predicated region
    $region14: #{tpu_custom_call.1} parent=1 // pred_check
      _
    $region15: #{tpu_custom_call.1} parent=1 // pred_check_branch
      %29 = sbr.rel (0) target = $region17
    $region16: #{tpu_custom_call.1} parent=1 // pred_region
      _
    $region17: #{tpu_custom_call.1} parent=1 // pred_fallthru
      _
    // Predicated region
    $region18: #{tpu_custom_call.1} parent=1 // pred_check
      _
    $region19: #{tpu_custom_call.1} parent=1 // pred_check_branch
      %31 = sbr.rel (0) target = $region21
    $region20: #{tpu_custom_call.1} parent=1 // pred_region
      _
    $region21: #{tpu_custom_call.1} parent=1 // pred_fallthru
      _
    // Predicated region
    $region22: #{tpu_custom_call.1} parent=1 // pred_check
      _
    $region23: #{tpu_custom_call.1} parent=1 // pred_check_branch
      %33 = sbr.rel (0) target = $region25
    $region24: #{tpu_custom_call.1} parent=1 // pred_region
      _
    $region25: #{tpu_custom_call.1} parent=1 // pred_fallthru
      _
    // Predicated region
    $region26: #{tpu_custom_call.1} parent=1 // pred_check
      _
    $region27: #{tpu_custom_call.1} parent=1 // pred_check_branch
      %35 = sbr.rel (0) target = $region29
    $region28: #{tpu_custom_call.1} parent=1 // pred_region
      %s37 = ssub.s32 16, 16
      %38 = vsyncadd [#allocation4], %s37
      %s40 = sshll.u32 %s6, 4
      %s41 = int_to_ptr.vmem [resolvable:$true] %s40
      %43 = dma.vmem_to_smem %s41, 16, [#allocation5], [#allocation4]
    $region29: #{tpu_custom_call.1} parent=1 // pred_fallthru
      _
    // Predicated region
    $region30: #{tpu_custom_call.1} parent=1 // pred_check
      _
    $region31: #{tpu_custom_call.1} parent=1 // pred_check_branch
      %45 = sbr.rel (0) target = $region33
    $region32: #{tpu_custom_call.1} parent=1 // pred_region
      %46 = dma.done [#allocation3], 32
    $region33: #{tpu_custom_call.1} parent=1 // pred_fallthru
      _
    // Predicated region
    $region34: #{tpu_custom_call.1} parent=1 // pred_check
      _
    $region35: #{tpu_custom_call.1} parent=1 // pred_check_branch
      %48 = sbr.rel (0) target = $region37
    $region36: #{tpu_custom_call.1} parent=1 // pred_region
      %49 = dma.done [#allocation4], 16
    $region37: #{tpu_custom_call.1} parent=1 // pred_fallthru
      _
    %50 = sfence
    %v51 = vld [vmem:[%s0] sm:$0xff]
    %v52 = vld [vmem:[%s0 + $0x8] sm:$0xff]
    %v53 = vld [vmem:[%s0 + $0x10] sm:$0xff]
    %v54 = vld [vmem:[%s0 + $0x18] sm:$0xff]
    %v55 = vld [vmem:[%s0 + $0x20] sm:$0xff]
    %v56 = vld [vmem:[%s0 + $0x28] sm:$0xff]
    %v57 = vld [vmem:[%s0 + $0x30] sm:$0xff]
    %v58 = vld [vmem:[%s0 + $0x38] sm:$0xff]
    %v59 = vld [vmem:[%s0 + $0x40] sm:$0xff]
    %v60 = vld [vmem:[%s0 + $0x48] sm:$0xff]
    %v61 = vld [vmem:[%s0 + $0x50] sm:$0xff]
    %v62 = vld [vmem:[%s0 + $0x58] sm:$0xff]
    %v63 = vld [vmem:[%s0 + $0x60] sm:$0xff]
    %v64 = vld [vmem:[%s0 + $0x68] sm:$0xff]
    %v65 = vld [vmem:[%s0 + $0x70] sm:$0xff]
    %v66 = vld [vmem:[%s0 + $0x78] sm:$0xff]
    %v67 = vld [vmem:[%s0 + $0x80] sm:$0xff]
    %v68 = vld [vmem:[%s0 + $0x88] sm:$0xff]
    %v69 = vld [vmem:[%s0 + $0x90] sm:$0xff]
    %v70 = vld [vmem:[%s0 + $0x98] sm:$0xff]
    %v71 = vld [vmem:[%s0 + $0xa0] sm:$0xff]
    %v72 = vld [vmem:[%s0 + $0xa8] sm:$0xff]
    %v73 = vld [vmem:[%s0 + $0xb0] sm:$0xff]
    %v74 = vld [vmem:[%s0 + $0xb8] sm:$0xff]
    %v75 = vld [vmem:[%s0 + $0xc0] sm:$0xff]
    %v76 = vld [vmem:[%s0 + $0xc8] sm:$0xff]
    %v77 = vld [vmem:[%s0 + $0xd0] sm:$0xff]
    %v78 = vld [vmem:[%s0 + $0xd8] sm:$0xff]
    %v79 = vld [vmem:[%s0 + $0xe0] sm:$0xff]
    %v80 = vld [vmem:[%s0 + $0xe8] sm:$0xff]
    %v81 = vld [vmem:[%s0 + $0xf0] sm:$0xff]
    %v82 = vld [vmem:[%s0 + $0xf8] sm:$0xff]
    %v83 = vld [vmem:[%s1] sm:$0xf]
    %85 = vset.pattern.permute.xlu0 0
    %86 = vperm.xlu0 %85, %v51
    %v87 = vpop.permute.xlu0 %86
    %90 = vset.pattern.permute.xlu0 0
    %91 = vperm.xlu0 %90, %v52
    %v92 = vpop.permute.xlu0 %91
    %95 = vset.pattern.permute.xlu0 0
    %96 = vperm.xlu0 %95, %v53
    %v97 = vpop.permute.xlu0 %96
    %100 = vset.pattern.permute.xlu0 0
    %101 = vperm.xlu0 %100, %v54
    %v102 = vpop.permute.xlu0 %101
    %105 = vset.pattern.permute.xlu0 0
    %106 = vperm.xlu0 %105, %v55
    %v107 = vpop.permute.xlu0 %106
    %110 = vset.pattern.permute.xlu0 0
    %111 = vperm.xlu0 %110, %v56
    %v112 = vpop.permute.xlu0 %111
    %115 = vset.pattern.permute.xlu0 0
    %116 = vperm.xlu0 %115, %v57
    %v117 = vpop.permute.xlu0 %116
    %120 = vset.pattern.permute.xlu0 0
    %121 = vperm.xlu0 %120, %v58
    %v122 = vpop.permute.xlu0 %121
    %125 = vset.pattern.permute.xlu0 0
    %126 = vperm.xlu0 %125, %v59
    %v127 = vpop.permute.xlu0 %126
    %130 = vset.pattern.permute.xlu0 0
    %131 = vperm.xlu0 %130, %v60
    %v132 = vpop.permute.xlu0 %131
    %135 = vset.pattern.permute.xlu0 0
    %136 = vperm.xlu0 %135, %v61
    %v137 = vpop.permute.xlu0 %136
    %140 = vset.pattern.permute.xlu0 0
    %141 = vperm.xlu0 %140, %v62
    %v142 = vpop.permute.xlu0 %141
    %145 = vset.pattern.permute.xlu0 0
    %146 = vperm.xlu0 %145, %v63
    %v147 = vpop.permute.xlu0 %146
    %150 = vset.pattern.permute.xlu0 0
    %151 = vperm.xlu0 %150, %v64
    %v152 = vpop.permute.xlu0 %151
    %155 = vset.pattern.permute.xlu0 0
    %156 = vperm.xlu0 %155, %v65
    %v157 = vpop.permute.xlu0 %156
    %160 = vset.pattern.permute.xlu0 0
    %161 = vperm.xlu0 %160, %v66
    %v162 = vpop.permute.xlu0 %161
    %165 = vset.pattern.permute.xlu0 0
    %166 = vperm.xlu0 %165, %v67
    %v167 = vpop.permute.xlu0 %166
    %170 = vset.pattern.permute.xlu0 0
    %171 = vperm.xlu0 %170, %v68
    %v172 = vpop.permute.xlu0 %171
    %175 = vset.pattern.permute.xlu0 0
    %176 = vperm.xlu0 %175, %v69
    %v177 = vpop.permute.xlu0 %176
    %180 = vset.pattern.permute.xlu0 0
    %181 = vperm.xlu0 %180, %v70
    %v182 = vpop.permute.xlu0 %181
    %185 = vset.pattern.permute.xlu0 0
    %186 = vperm.xlu0 %185, %v71
    %v187 = vpop.permute.xlu0 %186
    %190 = vset.pattern.permute.xlu0 0
    %191 = vperm.xlu0 %190, %v72
    %v192 = vpop.permute.xlu0 %191
    %195 = vset.pattern.permute.xlu0 0
    %196 = vperm.xlu0 %195, %v73
    %v197 = vpop.permute.xlu0 %196
    %200 = vset.pattern.permute.xlu0 0
    %201 = vperm.xlu0 %200, %v74
    %v202 = vpop.permute.xlu0 %201
    %205 = vset.pattern.permute.xlu0 0
    %206 = vperm.xlu0 %205, %v75
    %v207 = vpop.permute.xlu0 %206
    %210 = vset.pattern.permute.xlu0 0
    %211 = vperm.xlu0 %210, %v76
    %v212 = vpop.permute.xlu0 %211
    %215 = vset.pattern.permute.xlu0 0
    %216 = vperm.xlu0 %215, %v77
    %v217 = vpop.permute.xlu0 %216
    %220 = vset.pattern.permute.xlu0 0
    %221 = vperm.xlu0 %220, %v78
    %v222 = vpop.permute.xlu0 %221
    %225 = vset.pattern.permute.xlu0 0
    %226 = vperm.xlu0 %225, %v79
    %v227 = vpop.permute.xlu0 %226
    %230 = vset.pattern.permute.xlu0 0
    %231 = vperm.xlu0 %230, %v80
    %v232 = vpop.permute.xlu0 %231
    %235 = vset.pattern.permute.xlu0 0
    %236 = vperm.xlu0 %235, %v81
    %v237 = vpop.permute.xlu0 %236
    %240 = vset.pattern.permute.xlu0 0
    %241 = vperm.xlu0 %240, %v82
    %v242 = vpop.permute.xlu0 %241
    %v245 = vlaneseq
    %v246 = vshrl.u32 %v245, 7
    %v247 = vsub.s32 0, %v246
    %v248 = vrot.slane %v83, %v247
    %v249 = vlaneseq
    %v250 = vshrl.u32 %v249, 7
    %v251 = vsub.s32 2, %v250
    %v252 = vrot.slane %v83, %v251
    %v255 = vlaneseq
    %v256 = vshrl.u32 %v255, 7
    %v257 = vsub.s32 0, %v256
    %v258 = vrot.slane %v248, %v257
    %v259 = vlaneseq
    %v260 = vshrl.u32 %v259, 7
    %v261 = vsub.s32 0, %v260
    %v262 = vrot.slane %v252, %v261
    %v263 = vmul.f32 %v87, %v258
    %v264 = vmul.f32 %v87, %v262
    %v265 = vmul.f32 %v92, %v258
    %v266 = vmul.f32 %v92, %v262
    %v267 = vmul.f32 %v97, %v258
    %v268 = vmul.f32 %v97, %v262
    %v269 = vmul.f32 %v102, %v258
    %v270 = vmul.f32 %v102, %v262
    %v271 = vmul.f32 %v107, %v258
    %v272 = vmul.f32 %v107, %v262
    %v273 = vmul.f32 %v112, %v258
    %v274 = vmul.f32 %v112, %v262
    %v275 = vmul.f32 %v117, %v258
    %v276 = vmul.f32 %v117, %v262
    %v277 = vmul.f32 %v122, %v258
    %v278 = vmul.f32 %v122, %v262
    %v279 = vmul.f32 %v127, %v258
    %v280 = vmul.f32 %v127, %v262
    %v281 = vmul.f32 %v132, %v258
    %v282 = vmul.f32 %v132, %v262
    %v283 = vmul.f32 %v137, %v258
    %v284 = vmul.f32 %v137, %v262
    %v285 = vmul.f32 %v142, %v258
    %v286 = vmul.f32 %v142, %v262
    %v287 = vmul.f32 %v147, %v258
    %v288 = vmul.f32 %v147, %v262
    %v289 = vmul.f32 %v152, %v258
    %v290 = vmul.f32 %v152, %v262
    %v291 = vmul.f32 %v157, %v258
    %v292 = vmul.f32 %v157, %v262
    %v293 = vmul.f32 %v162, %v258
    %v294 = vmul.f32 %v162, %v262
    %v295 = vmul.f32 %v167, %v258
    %v296 = vmul.f32 %v167, %v262
    %v297 = vmul.f32 %v172, %v258
    %v298 = vmul.f32 %v172, %v262
    %v299 = vmul.f32 %v177, %v258
    %v300 = vmul.f32 %v177, %v262
    %v301 = vmul.f32 %v182, %v258
    %v302 = vmul.f32 %v182, %v262
    %v303 = vmul.f32 %v187, %v258
    %v304 = vmul.f32 %v187, %v262
    %v305 = vmul.f32 %v192, %v258
    %v306 = vmul.f32 %v192, %v262
    %v307 = vmul.f32 %v197, %v258
    %v308 = vmul.f32 %v197, %v262
    %v309 = vmul.f32 %v202, %v258
    %v310 = vmul.f32 %v202, %v262
    %v311 = vmul.f32 %v207, %v258
    %v312 = vmul.f32 %v207, %v262
    %v313 = vmul.f32 %v212, %v258
    %v314 = vmul.f32 %v212, %v262
    %v315 = vmul.f32 %v217, %v258
    %v316 = vmul.f32 %v217, %v262
    %v317 = vmul.f32 %v222, %v258
    %v318 = vmul.f32 %v222, %v262
    %v319 = vmul.f32 %v227, %v258
    %v320 = vmul.f32 %v227, %v262
    %v321 = vmul.f32 %v232, %v258
    %v322 = vmul.f32 %v232, %v262
    %v323 = vmul.f32 %v237, %v258
    %v324 = vmul.f32 %v237, %v262
    %v325 = vmul.f32 %v242, %v258
    %v326 = vmul.f32 %v242, %v262
    %327 = vset.pattern.permute.xlu0 1
    %328 = vperm.xlu0 %327, %v51
    %v329 = vpop.permute.xlu0 %328
    %331 = vset.pattern.permute.xlu0 1
    %332 = vperm.xlu0 %331, %v52
    %v333 = vpop.permute.xlu0 %332
    %335 = vset.pattern.permute.xlu0 1
    %336 = vperm.xlu0 %335, %v53
    %v337 = vpop.permute.xlu0 %336
    %339 = vset.pattern.permute.xlu0 1
    %340 = vperm.xlu0 %339, %v54
    %v341 = vpop.permute.xlu0 %340
    %343 = vset.pattern.permute.xlu0 1
    %344 = vperm.xlu0 %343, %v55
    %v345 = vpop.permute.xlu0 %344
    %347 = vset.pattern.permute.xlu0 1
    %348 = vperm.xlu0 %347, %v56
    %v349 = vpop.permute.xlu0 %348
    %351 = vset.pattern.permute.xlu0 1
    %352 = vperm.xlu0 %351, %v57
    %v353 = vpop.permute.xlu0 %352
    %355 = vset.pattern.permute.xlu0 1
    %356 = vperm.xlu0 %355, %v58
    %v357 = vpop.permute.xlu0 %356
    %359 = vset.pattern.permute.xlu0 1
    %360 = vperm.xlu0 %359, %v59
    %v361 = vpop.permute.xlu0 %360
    %363 = vset.pattern.permute.xlu0 1
    %364 = vperm.xlu0 %363, %v60
    %v365 = vpop.permute.xlu0 %364
    %367 = vset.pattern.permute.xlu0 1
    %368 = vperm.xlu0 %367, %v61
    %v369 = vpop.permute.xlu0 %368
    %371 = vset.pattern.permute.xlu0 1
    %372 = vperm.xlu0 %371, %v62
    %v373 = vpop.permute.xlu0 %372
    %375 = vset.pattern.permute.xlu0 1
    %376 = vperm.xlu0 %375, %v63
    %v377 = vpop.permute.xlu0 %376
    %379 = vset.pattern.permute.xlu0 1
    %380 = vperm.xlu0 %379, %v64
    %v381 = vpop.permute.xlu0 %380
    %383 = vset.pattern.permute.xlu0 1
    %384 = vperm.xlu0 %383, %v65
    %v385 = vpop.permute.xlu0 %384
    %387 = vset.pattern.permute.xlu0 1
    %388 = vperm.xlu0 %387, %v66
    %v389 = vpop.permute.xlu0 %388
    %391 = vset.pattern.permute.xlu0 1
    %392 = vperm.xlu0 %391, %v67
    %v393 = vpop.permute.xlu0 %392
    %395 = vset.pattern.permute.xlu0 1
    %396 = vperm.xlu0 %395, %v68
    %v397 = vpop.permute.xlu0 %396
    %399 = vset.pattern.permute.xlu0 1
    %400 = vperm.xlu0 %399, %v69
    %v401 = vpop.permute.xlu0 %400
    %403 = vset.pattern.permute.xlu0 1
    %404 = vperm.xlu0 %403, %v70
    %v405 = vpop.permute.xlu0 %404
    %407 = vset.pattern.permute.xlu0 1
    %408 = vperm.xlu0 %407, %v71
    %v409 = vpop.permute.xlu0 %408
    %411 = vset.pattern.permute.xlu0 1
    %412 = vperm.xlu0 %411, %v72
    %v413 = vpop.permute.xlu0 %412
    %415 = vset.pattern.permute.xlu0 1
    %416 = vperm.xlu0 %415, %v73
    %v417 = vpop.permute.xlu0 %416
    %419 = vset.pattern.permute.xlu0 1
    %420 = vperm.xlu0 %419, %v74
    %v421 = vpop.permute.xlu0 %420
    %423 = vset.pattern.permute.xlu0 1
    %424 = vperm.xlu0 %423, %v75
    %v425 = vpop.permute.xlu0 %424
    %427 = vset.pattern.permute.xlu0 1
    %428 = vperm.xlu0 %427, %v76
    %v429 = vpop.permute.xlu0 %428
    %431 = vset.pattern.permute.xlu0 1
    %432 = vperm.xlu0 %431, %v77
    %v433 = vpop.permute.xlu0 %432
    %435 = vset.pattern.permute.xlu0 1
    %436 = vperm.xlu0 %435, %v78
    %v437 = vpop.permute.xlu0 %436
    %439 = vset.pattern.permute.xlu0 1
    %440 = vperm.xlu0 %439, %v79
    %v441 = vpop.permute.xlu0 %440
    %443 = vset.pattern.permute.xlu0 1
    %444 = vperm.xlu0 %443, %v80
    %v445 = vpop.permute.xlu0 %444
    %447 = vset.pattern.permute.xlu0 1
    %448 = vperm.xlu0 %447, %v81
    %v449 = vpop.permute.xlu0 %448
    %451 = vset.pattern.permute.xlu0 1
    %452 = vperm.xlu0 %451, %v82
    %v453 = vpop.permute.xlu0 %452
    %v455 = vlaneseq
    %v456 = vshrl.u32 %v455, 7
    %v457 = vsub.s32 1, %v456
    %v458 = vrot.slane %v83, %v457
    %v459 = vlaneseq
    %v460 = vshrl.u32 %v459, 7
    %v461 = vsub.s32 3, %v460
    %v462 = vrot.slane %v83, %v461
    %v465 = vlaneseq
    %v466 = vshrl.u32 %v465, 7
    %v467 = vsub.s32 1, %v466
    %v468 = vrot.slane %v458, %v467
    %v469 = vlaneseq
    %v470 = vshrl.u32 %v469, 7
    %v471 = vsub.s32 1, %v470
    %v472 = vrot.slane %v462, %v471
    %v473 = vmul.f32 %v329, %v468
    %v474 = vmul.f32 %v329, %v472
    %v475 = vmul.f32 %v333, %v468
    %v476 = vmul.f32 %v333, %v472
    %v477 = vmul.f32 %v337, %v468
    %v478 = vmul.f32 %v337, %v472
    %v479 = vmul.f32 %v341, %v468
    %v480 = vmul.f32 %v341, %v472
    %v481 = vmul.f32 %v345, %v468
    %v482 = vmul.f32 %v345, %v472
    %v483 = vmul.f32 %v349, %v468
    %v484 = vmul.f32 %v349, %v472
    %v485 = vmul.f32 %v353, %v468
    %v486 = vmul.f32 %v353, %v472
    %v487 = vmul.f32 %v357, %v468
    %v488 = vmul.f32 %v357, %v472
    %v489 = vmul.f32 %v361, %v468
    %v490 = vmul.f32 %v361, %v472
    %v491 = vmul.f32 %v365, %v468
    %v492 = vmul.f32 %v365, %v472
    %v493 = vmul.f32 %v369, %v468
    %v494 = vmul.f32 %v369, %v472
    %v495 = vmul.f32 %v373, %v468
    %v496 = vmul.f32 %v373, %v472
    %v497 = vmul.f32 %v377, %v468
    %v498 = vmul.f32 %v377, %v472
    %v499 = vmul.f32 %v381, %v468
    %v500 = vmul.f32 %v381, %v472
    %v501 = vmul.f32 %v385, %v468
    %v502 = vmul.f32 %v385, %v472
    %v503 = vmul.f32 %v389, %v468
    %v504 = vmul.f32 %v389, %v472
    %v505 = vmul.f32 %v393, %v468
    %v506 = vmul.f32 %v393, %v472
    %v507 = vmul.f32 %v397, %v468
    %v508 = vmul.f32 %v397, %v472
    %v509 = vmul.f32 %v401, %v468
    %v510 = vmul.f32 %v401, %v472
    %v511 = vmul.f32 %v405, %v468
    %v512 = vmul.f32 %v405, %v472
    %v513 = vmul.f32 %v409, %v468
    %v514 = vmul.f32 %v409, %v472
    %v515 = vmul.f32 %v413, %v468
    %v516 = vmul.f32 %v413, %v472
    %v517 = vmul.f32 %v417, %v468
    %v518 = vmul.f32 %v417, %v472
    %v519 = vmul.f32 %v421, %v468
    %v520 = vmul.f32 %v421, %v472
    %v521 = vmul.f32 %v425, %v468
    %v522 = vmul.f32 %v425, %v472
    %v523 = vmul.f32 %v429, %v468
    %v524 = vmul.f32 %v429, %v472
    %v525 = vmul.f32 %v433, %v468
    %v526 = vmul.f32 %v433, %v472
    %v527 = vmul.f32 %v437, %v468
    %v528 = vmul.f32 %v437, %v472
    %v529 = vmul.f32 %v441, %v468
    %v530 = vmul.f32 %v441, %v472
    %v531 = vmul.f32 %v445, %v468
    %v532 = vmul.f32 %v445, %v472
    %v533 = vmul.f32 %v449, %v468
    %v534 = vmul.f32 %v449, %v472
    %v535 = vmul.f32 %v453, %v468
    %v536 = vmul.f32 %v453, %v472
    %v537 = vadd.f32 %v263, %v473
    %v538 = vadd.f32 %v264, %v474
    %v539 = vadd.f32 %v265, %v475
    %v540 = vadd.f32 %v266, %v476
    %v541 = vadd.f32 %v267, %v477
    %v542 = vadd.f32 %v268, %v478
    %v543 = vadd.f32 %v269, %v479
    %v544 = vadd.f32 %v270, %v480
    %v545 = vadd.f32 %v271, %v481
    %v546 = vadd.f32 %v272, %v482
    %v547 = vadd.f32 %v273, %v483
    %v548 = vadd.f32 %v274, %v484
    %v549 = vadd.f32 %v275, %v485
    %v550 = vadd.f32 %v276, %v486
    %v551 = vadd.f32 %v277, %v487
    %v552 = vadd.f32 %v278, %v488
    %v553 = vadd.f32 %v279, %v489
    %v554 = vadd.f32 %v280, %v490
    %v555 = vadd.f32 %v281, %v491
    %v556 = vadd.f32 %v282, %v492
    %v557 = vadd.f32 %v283, %v493
    %v558 = vadd.f32 %v284, %v494
    %v559 = vadd.f32 %v285, %v495
    %v560 = vadd.f32 %v286, %v496
    %v561 = vadd.f32 %v287, %v497
    %v562 = vadd.f32 %v288, %v498
    %v563 = vadd.f32 %v289, %v499
    %v564 = vadd.f32 %v290, %v500
    %v565 = vadd.f32 %v291, %v501
    %v566 = vadd.f32 %v292, %v502
    %v567 = vadd.f32 %v293, %v503
    %v568 = vadd.f32 %v294, %v504
    %v569 = vadd.f32 %v295, %v505
    %v570 = vadd.f32 %v296, %v506
    %v571 = vadd.f32 %v297, %v507
    %v572 = vadd.f32 %v298, %v508
    %v573 = vadd.f32 %v299, %v509
    %v574 = vadd.f32 %v300, %v510
    %v575 = vadd.f32 %v301, %v511
    %v576 = vadd.f32 %v302, %v512
    %v577 = vadd.f32 %v303, %v513
    %v578 = vadd.f32 %v304, %v514
    %v579 = vadd.f32 %v305, %v515
    %v580 = vadd.f32 %v306, %v516
    %v581 = vadd.f32 %v307, %v517
    %v582 = vadd.f32 %v308, %v518
    %v583 = vadd.f32 %v309, %v519
    %v584 = vadd.f32 %v310, %v520
    %v585 = vadd.f32 %v311, %v521
    %v586 = vadd.f32 %v312, %v522
    %v587 = vadd.f32 %v313, %v523
    %v588 = vadd.f32 %v314, %v524
    %v589 = vadd.f32 %v315, %v525
    %v590 = vadd.f32 %v316, %v526
    %v591 = vadd.f32 %v317, %v527
    %v592 = vadd.f32 %v318, %v528
    %v593 = vadd.f32 %v319, %v529
    %v594 = vadd.f32 %v320, %v530
    %v595 = vadd.f32 %v321, %v531
    %v596 = vadd.f32 %v322, %v532
    %v597 = vadd.f32 %v323, %v533
    %v598 = vadd.f32 %v324, %v534
    %v599 = vadd.f32 %v325, %v535
    %v600 = vadd.f32 %v326, %v536
    %v601 = vld [vmem:[#allocation2] sm:$0x3]
    %v603 = vlaneseq
    %v604 = vshrl.u32 %v603, 7
    %v605 = vsub.s32 0, %v604
    %v606 = vrot.slane %v601, %v605
    %v607 = vlaneseq
    %v608 = vshrl.u32 %v607, 7
    %v609 = vsub.s32 1, %v608
    %v610 = vrot.slane %v601, %v609
    %v613 = vadd.f32 %v537, %v606
    %v614 = vadd.f32 %v538, %v610
    %v615 = vadd.f32 %v539, %v606
    %v616 = vadd.f32 %v540, %v610
    %v617 = vadd.f32 %v541, %v606
    %v618 = vadd.f32 %v542, %v610
    %v619 = vadd.f32 %v543, %v606
    %v620 = vadd.f32 %v544, %v610
    %v621 = vadd.f32 %v545, %v606
    %v622 = vadd.f32 %v546, %v610
    %v623 = vadd.f32 %v547, %v606
    %v624 = vadd.f32 %v548, %v610
    %v625 = vadd.f32 %v549, %v606
    %v626 = vadd.f32 %v550, %v610
    %v627 = vadd.f32 %v551, %v606
    %v628 = vadd.f32 %v552, %v610
    %v629 = vadd.f32 %v553, %v606
    %v630 = vadd.f32 %v554, %v610
    %v631 = vadd.f32 %v555, %v606
    %v632 = vadd.f32 %v556, %v610
    %v633 = vadd.f32 %v557, %v606
    %v634 = vadd.f32 %v558, %v610
    %v635 = vadd.f32 %v559, %v606
    %v636 = vadd.f32 %v560, %v610
    %v637 = vadd.f32 %v561, %v606
    %v638 = vadd.f32 %v562, %v610
    %v639 = vadd.f32 %v563, %v606
    %v640 = vadd.f32 %v564, %v610
    %v641 = vadd.f32 %v565, %v606
    %v642 = vadd.f32 %v566, %v610
    %v643 = vadd.f32 %v567, %v606
    %v644 = vadd.f32 %v568, %v610
    %v645 = vadd.f32 %v569, %v606
    %v646 = vadd.f32 %v570, %v610
    %v647 = vadd.f32 %v571, %v606
    %v648 = vadd.f32 %v572, %v610
    %v649 = vadd.f32 %v573, %v606
    %v650 = vadd.f32 %v574, %v610
    %v651 = vadd.f32 %v575, %v606
    %v652 = vadd.f32 %v576, %v610
    %v653 = vadd.f32 %v577, %v606
    %v654 = vadd.f32 %v578, %v610
    %v655 = vadd.f32 %v579, %v606
    %v656 = vadd.f32 %v580, %v610
    %v657 = vadd.f32 %v581, %v606
    %v658 = vadd.f32 %v582, %v610
    %v659 = vadd.f32 %v583, %v606
    %v660 = vadd.f32 %v584, %v610
    %v661 = vadd.f32 %v585, %v606
    %v662 = vadd.f32 %v586, %v610
    %v663 = vadd.f32 %v587, %v606
    %v664 = vadd.f32 %v588, %v610
    %v665 = vadd.f32 %v589, %v606
    %v666 = vadd.f32 %v590, %v610
    %v667 = vadd.f32 %v591, %v606
    %v668 = vadd.f32 %v592, %v610
    %v669 = vadd.f32 %v593, %v606
    %v670 = vadd.f32 %v594, %v610
    %v671 = vadd.f32 %v595, %v606
    %v672 = vadd.f32 %v596, %v610
    %v673 = vadd.f32 %v597, %v606
    %v674 = vadd.f32 %v598, %v610
    %v675 = vadd.f32 %v599, %v606
    %v676 = vadd.f32 %v600, %v610
    %v677 = vmax.f32 %v613, 0.0
    %v678 = vmax.f32 %v614, 0.0
    %v679 = vmax.f32 %v615, 0.0
    %v680 = vmax.f32 %v616, 0.0
    %v681 = vmax.f32 %v617, 0.0
    %v682 = vmax.f32 %v618, 0.0
    %v683 = vmax.f32 %v619, 0.0
    %v684 = vmax.f32 %v620, 0.0
    %v685 = vmax.f32 %v621, 0.0
    %v686 = vmax.f32 %v622, 0.0
    %v687 = vmax.f32 %v623, 0.0
    %v688 = vmax.f32 %v624, 0.0
    %v689 = vmax.f32 %v625, 0.0
    %v690 = vmax.f32 %v626, 0.0
    %v691 = vmax.f32 %v627, 0.0
    %v692 = vmax.f32 %v628, 0.0
    %v693 = vmax.f32 %v629, 0.0
    %v694 = vmax.f32 %v630, 0.0
    %v695 = vmax.f32 %v631, 0.0
    %v696 = vmax.f32 %v632, 0.0
    %v697 = vmax.f32 %v633, 0.0
    %v698 = vmax.f32 %v634, 0.0
    %v699 = vmax.f32 %v635, 0.0
    %v700 = vmax.f32 %v636, 0.0
    %v701 = vmax.f32 %v637, 0.0
    %v702 = vmax.f32 %v638, 0.0
    %v703 = vmax.f32 %v639, 0.0
    %v704 = vmax.f32 %v640, 0.0
    %v705 = vmax.f32 %v641, 0.0
    %v706 = vmax.f32 %v642, 0.0
    %v707 = vmax.f32 %v643, 0.0
    %v708 = vmax.f32 %v644, 0.0
    %v709 = vmax.f32 %v645, 0.0
    %v710 = vmax.f32 %v646, 0.0
    %v711 = vmax.f32 %v647, 0.0
    %v712 = vmax.f32 %v648, 0.0
    %v713 = vmax.f32 %v649, 0.0
    %v714 = vmax.f32 %v650, 0.0
    %v715 = vmax.f32 %v651, 0.0
    %v716 = vmax.f32 %v652, 0.0
    %v717 = vmax.f32 %v653, 0.0
    %v718 = vmax.f32 %v654, 0.0
    %v719 = vmax.f32 %v655, 0.0
    %v720 = vmax.f32 %v656, 0.0
    %v721 = vmax.f32 %v657, 0.0
    %v722 = vmax.f32 %v658, 0.0
    %v723 = vmax.f32 %v659, 0.0
    %v724 = vmax.f32 %v660, 0.0
    %v725 = vmax.f32 %v661, 0.0
    %v726 = vmax.f32 %v662, 0.0
    %v727 = vmax.f32 %v663, 0.0
    %v728 = vmax.f32 %v664, 0.0
    %v729 = vmax.f32 %v665, 0.0
    %v730 = vmax.f32 %v666, 0.0
    %v731 = vmax.f32 %v667, 0.0
    %v732 = vmax.f32 %v668, 0.0
    %v733 = vmax.f32 %v669, 0.0
    %v734 = vmax.f32 %v670, 0.0
    %v735 = vmax.f32 %v671, 0.0
    %v736 = vmax.f32 %v672, 0.0
    %v737 = vmax.f32 %v673, 0.0
    %v738 = vmax.f32 %v674, 0.0
    %v739 = vmax.f32 %v675, 0.0
    %v740 = vmax.f32 %v676, 0.0
    %v741 = vpack.c.bf16 %v679, %v677
    %v742 = vpack.c.bf16 %v680, %v678
    %v743 = vpack.c.bf16 %v683, %v681
    %v744 = vpack.c.bf16 %v684, %v682
    %v745 = vpack.c.bf16 %v687, %v685
    %v746 = vpack.c.bf16 %v688, %v686
    %v747 = vpack.c.bf16 %v691, %v689
    %v748 = vpack.c.bf16 %v692, %v690
    %v749 = vpack.c.bf16 %v695, %v693
    %v750 = vpack.c.bf16 %v696, %v694
    %v751 = vpack.c.bf16 %v699, %v697
    %v752 = vpack.c.bf16 %v700, %v698
    %v753 = vpack.c.bf16 %v703, %v701
    %v754 = vpack.c.bf16 %v704, %v702
    %v755 = vpack.c.bf16 %v707, %v705
    %v756 = vpack.c.bf16 %v708, %v706
    %v757 = vpack.c.bf16 %v711, %v709
    %v758 = vpack.c.bf16 %v712, %v710
    %v759 = vpack.c.bf16 %v715, %v713
    %v760 = vpack.c.bf16 %v716, %v714
    %v761 = vpack.c.bf16 %v719, %v717
    %v762 = vpack.c.bf16 %v720, %v718
    %v763 = vpack.c.bf16 %v723, %v721
    %v764 = vpack.c.bf16 %v724, %v722
    %v765 = vpack.c.bf16 %v727, %v725
    %v766 = vpack.c.bf16 %v728, %v726
    %v767 = vpack.c.bf16 %v731, %v729
    %v768 = vpack.c.bf16 %v732, %v730
    %v769 = vpack.c.bf16 %v735, %v733
    %v770 = vpack.c.bf16 %v736, %v734
    %v771 = vpack.c.bf16 %v739, %v737
    %v772 = vpack.c.bf16 %v740, %v738
    %v773 = vld [vmem:[%s3] sm:$0xff]
    %v774 = vld [vmem:[%s3 + $0x8] sm:$0xff]
    %v775 = vld [vmem:[%s3 + $0x10] sm:$0xff]
    %v776 = vld [vmem:[%s3 + $0x18] sm:$0xff]
    %v777 = vld [vmem:[%s3 + $0x20] sm:$0xff]
    %v778 = vld [vmem:[%s3 + $0x28] sm:$0xff]
    %v779 = vld [vmem:[%s3 + $0x30] sm:$0xff]
    %v780 = vld [vmem:[%s3 + $0x38] sm:$0xff]
    %v781 = vld [vmem:[%s3 + $0x40] sm:$0xff]
    %v782 = vld [vmem:[%s3 + $0x48] sm:$0xff]
    %v783 = vld [vmem:[%s3 + $0x50] sm:$0xff]
    %v784 = vld [vmem:[%s3 + $0x58] sm:$0xff]
    %v785 = vld [vmem:[%s3 + $0x60] sm:$0xff]
    %v786 = vld [vmem:[%s3 + $0x68] sm:$0xff]
    %v787 = vld [vmem:[%s3 + $0x70] sm:$0xff]
    %v788 = vld [vmem:[%s3 + $0x78] sm:$0xff]
    %v789 = vld [vmem:[%s3 + $0x80] sm:$0xff]
    %v790 = vld [vmem:[%s3 + $0x88] sm:$0xff]
    %v791 = vld [vmem:[%s3 + $0x90] sm:$0xff]
    %v792 = vld [vmem:[%s3 + $0x98] sm:$0xff]
    %v793 = vld [vmem:[%s3 + $0xa0] sm:$0xff]
    %v794 = vld [vmem:[%s3 + $0xa8] sm:$0xff]
    %v795 = vld [vmem:[%s3 + $0xb0] sm:$0xff]
    %v796 = vld [vmem:[%s3 + $0xb8] sm:$0xff]
    %v797 = vld [vmem:[%s3 + $0xc0] sm:$0xff]
    %v798 = vld [vmem:[%s3 + $0xc8] sm:$0xff]
    %v799 = vld [vmem:[%s3 + $0xd0] sm:$0xff]
    %v800 = vld [vmem:[%s3 + $0xd8] sm:$0xff]
    %v801 = vld [vmem:[%s3 + $0xe0] sm:$0xff]
    %v802 = vld [vmem:[%s3 + $0xe8] sm:$0xff]
    %v803 = vld [vmem:[%s3 + $0xf0] sm:$0xff]
    %v804 = vld [vmem:[%s3 + $0xf8] sm:$0xff]
    %v805 = vld [vmem:[%s4] sm:$0x3]
    %v807 = vlaneseq
    %v808 = vshrl.u32 %v807, 7
    %v809 = vsub.s32 0, %v808
    %v810 = vrot.slane %v805, %v809
    %v811 = vlaneseq
    %v812 = vshrl.u32 %v811, 7
    %v813 = vsub.s32 1, %v812
    %v814 = vrot.slane %v805, %v813
    %v849 = vunpack.c.l.b16 %v773
    %v850 = vunpack.c.h.b16 %v773
    %v851 = vunpack.c.l.b16 %v774
    %v852 = vunpack.c.h.b16 %v774
    %v853 = vunpack.c.l.b16 %v775
    %v854 = vunpack.c.h.b16 %v775
    %v855 = vunpack.c.l.b16 %v776
    %v856 = vunpack.c.h.b16 %v776
    %v857 = vunpack.c.l.b16 %v777
    %v858 = vunpack.c.h.b16 %v777
    %v859 = vunpack.c.l.b16 %v778
    %v860 = vunpack.c.h.b16 %v778
    %v861 = vunpack.c.l.b16 %v779
    %v862 = vunpack.c.h.b16 %v779
    %v863 = vunpack.c.l.b16 %v780
    %v864 = vunpack.c.h.b16 %v780
    %v865 = vunpack.c.l.b16 %v781
    %v866 = vunpack.c.h.b16 %v781
    %v867 = vunpack.c.l.b16 %v782
    %v868 = vunpack.c.h.b16 %v782
    %v869 = vunpack.c.l.b16 %v783
    %v870 = vunpack.c.h.b16 %v783
    %v871 = vunpack.c.l.b16 %v784
    %v872 = vunpack.c.h.b16 %v784
    %v873 = vunpack.c.l.b16 %v785
    %v874 = vunpack.c.h.b16 %v785
    %v875 = vunpack.c.l.b16 %v786
    %v876 = vunpack.c.h.b16 %v786
    %v877 = vunpack.c.l.b16 %v787
    %v878 = vunpack.c.h.b16 %v787
    %v879 = vunpack.c.l.b16 %v788
    %v880 = vunpack.c.h.b16 %v788
    %v881 = vunpack.c.l.b16 %v789
    %v882 = vunpack.c.h.b16 %v789
    %v883 = vunpack.c.l.b16 %v790
    %v884 = vunpack.c.h.b16 %v790
    %v885 = vunpack.c.l.b16 %v791
    %v886 = vunpack.c.h.b16 %v791
    %v887 = vunpack.c.l.b16 %v792
    %v888 = vunpack.c.h.b16 %v792
    %v889 = vunpack.c.l.b16 %v793
    %v890 = vunpack.c.h.b16 %v793
    %v891 = vunpack.c.l.b16 %v794
    %v892 = vunpack.c.h.b16 %v794
    %v893 = vunpack.c.l.b16 %v795
    %v894 = vunpack.c.h.b16 %v795
    %v895 = vunpack.c.l.b16 %v796
    %v896 = vunpack.c.h.b16 %v796
    %v897 = vunpack.c.l.b16 %v797
    %v898 = vunpack.c.h.b16 %v797
    %v899 = vunpack.c.l.b16 %v798
    %v900 = vunpack.c.h.b16 %v798
    %v901 = vunpack.c.l.b16 %v799
    %v902 = vunpack.c.h.b16 %v799
    %v903 = vunpack.c.l.b16 %v800
    %v904 = vunpack.c.h.b16 %v800
    %v905 = vunpack.c.l.b16 %v801
    %v906 = vunpack.c.h.b16 %v801
    %v907 = vunpack.c.l.b16 %v802
    %v908 = vunpack.c.h.b16 %v802
    %v909 = vunpack.c.l.b16 %v803
    %v910 = vunpack.c.h.b16 %v803
    %v911 = vunpack.c.l.b16 %v804
    %v912 = vunpack.c.h.b16 %v804
    %v913 = vpack.c.b16 %v851, %v849
    %v914 = vpack.c.b16 %v852, %v850
    %v915 = vpack.c.b16 %v855, %v853
    %v916 = vpack.c.b16 %v856, %v854
    %v917 = vpack.c.b16 %v859, %v857
    %v918 = vpack.c.b16 %v860, %v858
    %v919 = vpack.c.b16 %v863, %v861
    %v920 = vpack.c.b16 %v864, %v862
    %v921 = vpack.c.b16 %v867, %v865
    %v922 = vpack.c.b16 %v868, %v866
    %v923 = vpack.c.b16 %v871, %v869
    %v924 = vpack.c.b16 %v872, %v870
    %v925 = vpack.c.b16 %v875, %v873
    %v926 = vpack.c.b16 %v876, %v874
    %v927 = vpack.c.b16 %v879, %v877
    %v928 = vpack.c.b16 %v880, %v878
    %v929 = vpack.c.b16 %v883, %v881
    %v930 = vpack.c.b16 %v884, %v882
    %v931 = vpack.c.b16 %v887, %v885
    %v932 = vpack.c.b16 %v888, %v886
    %v933 = vpack.c.b16 %v891, %v889
    %v934 = vpack.c.b16 %v892, %v890
    %v935 = vpack.c.b16 %v895, %v893
    %v936 = vpack.c.b16 %v896, %v894
    %v937 = vpack.c.b16 %v899, %v897
    %v938 = vpack.c.b16 %v900, %v898
    %v939 = vpack.c.b16 %v903, %v901
    %v940 = vpack.c.b16 %v904, %v902
    %v941 = vpack.c.b16 %v907, %v905
    %v942 = vpack.c.b16 %v908, %v906
    %v943 = vpack.c.b16 %v911, %v909
    %v944 = vpack.c.b16 %v912, %v910
    %977 = vmatprep.subr.bf16.mxu0 %v928
    %978 = vmatpush1.bf16.msra.mxu0 %v927
    %979 = vmatprep.subr.bf16.mxu0 %v926
    %980 = vmatpush1.bf16.msra.mxu0 %v925
    %981 = vmatprep.subr.bf16.mxu0 %v924
    %982 = vmatpush1.bf16.msra.mxu0 %v923
    %983 = vmatprep.subr.bf16.mxu0 %v922
    %984 = vmatpush1.bf16.msra.mxu0 %v921
    %985 = vmatprep.subr.bf16.mxu0 %v920
    %986 = vmatpush1.bf16.msra.mxu0 %v919
    %987 = vmatprep.subr.bf16.mxu0 %v918
    %988 = vmatpush1.bf16.msra.mxu0 %v917
    %989 = vmatprep.subr.bf16.mxu0 %v916
    %990 = vmatpush1.bf16.msra.mxu0 %v915
    %991 = vmatprep.subr.bf16.mxu0 %v914
    %992 = vmatpush1.bf16.msra.mxu0 %v913
    %993 = vmatprep.subr.bf16.mxu0 %v944
    %994 = vmatpush2.bf16.msra.mxu0 %v943
    %995 = vmatprep.subr.bf16.mxu0 %v942
    %996 = vmatpush2.bf16.msra.mxu0 %v941
    %997 = vmatprep.subr.bf16.mxu0 %v940
    %998 = vmatpush2.bf16.msra.mxu0 %v939
    %999 = vmatprep.subr.bf16.mxu0 %v938
    %1000 = vmatpush2.bf16.msra.mxu0 %v937
    %1001 = vmatprep.subr.bf16.mxu0 %v936
    %1002 = vmatpush2.bf16.msra.mxu0 %v935
    %1003 = vmatprep.subr.bf16.mxu0 %v934
    %1004 = vmatpush2.bf16.msra.mxu0 %v933
    %1005 = vmatprep.subr.bf16.mxu0 %v932
    %1006 = vmatpush2.bf16.msra.mxu0 %v931
    %1007 = vmatprep.subr.bf16.mxu0 %v930
    %1008 = vmatpush2.bf16.msra.mxu0 %v929
    %1009 = vmatprep.mubr.bf16.mxu0 %v742
    %1010 = vmatmul.mubr.bf16.gmra.mxu0 %v741
    %v1011 = vpop.f32.mrf.mxu0
    %v1012 = vadd.f32 %v810, %v1011
    %v1013 = vpop.f32.mrf.mxu0
    %v1014 = vadd.f32 %v814, %v1013
    %v1015 = vpop.f32.mrf.mxu0
    %v1016 = vadd.f32 %v810, %v1015
    %v1017 = vpop.f32.mrf.mxu0
    %v1018 = vadd.f32 %v814, %v1017
    %1019 = vmatprep.mubr.bf16.mxu0 %v744
    %1020 = vmatmul.mubr.bf16.gmra.mxu0 %v743
    %v1021 = vpop.f32.mrf.mxu0
    %v1022 = vadd.f32 %v810, %v1021
    %v1023 = vpop.f32.mrf.mxu0
    %v1024 = vadd.f32 %v814, %v1023
    %v1025 = vpop.f32.mrf.mxu0
    %v1026 = vadd.f32 %v810, %v1025
    %v1027 = vpop.f32.mrf.mxu0
    %v1028 = vadd.f32 %v814, %v1027
    %1029 = vmatprep.mubr.bf16.mxu0 %v746
    %1030 = vmatmul.mubr.bf16.gmra.mxu0 %v745
    %v1031 = vpop.f32.mrf.mxu0
    %v1032 = vadd.f32 %v810, %v1031
    %v1033 = vpop.f32.mrf.mxu0
    %v1034 = vadd.f32 %v814, %v1033
    %v1035 = vpop.f32.mrf.mxu0
    %v1036 = vadd.f32 %v810, %v1035
    %v1037 = vpop.f32.mrf.mxu0
    %v1038 = vadd.f32 %v814, %v1037
    %1039 = vmatprep.mubr.bf16.mxu0 %v748
    %1040 = vmatmul.mubr.bf16.gmra.mxu0 %v747
    %v1041 = vpop.f32.mrf.mxu0
    %v1042 = vadd.f32 %v810, %v1041
    %v1043 = vpop.f32.mrf.mxu0
    %v1044 = vadd.f32 %v814, %v1043
    %v1045 = vpop.f32.mrf.mxu0
    %v1046 = vadd.f32 %v810, %v1045
    %v1047 = vpop.f32.mrf.mxu0
    %v1048 = vadd.f32 %v814, %v1047
    %1049 = vmatprep.mubr.bf16.mxu0 %v750
    %1050 = vmatmul.mubr.bf16.gmra.mxu0 %v749
    %v1051 = vpop.f32.mrf.mxu0
    %v1052 = vadd.f32 %v810, %v1051
    %v1053 = vpop.f32.mrf.mxu0
    %v1054 = vadd.f32 %v814, %v1053
    %v1055 = vpop.f32.mrf.mxu0
    %v1056 = vadd.f32 %v810, %v1055
    %v1057 = vpop.f32.mrf.mxu0
    %v1058 = vadd.f32 %v814, %v1057
    %1059 = vmatprep.mubr.bf16.mxu0 %v752
    %1060 = vmatmul.mubr.bf16.gmra.mxu0 %v751
    %v1061 = vpop.f32.mrf.mxu0
    %v1062 = vadd.f32 %v810, %v1061
    %v1063 = vpop.f32.mrf.mxu0
    %v1064 = vadd.f32 %v814, %v1063
    %v1065 = vpop.f32.mrf.mxu0
    %v1066 = vadd.f32 %v810, %v1065
    %v1067 = vpop.f32.mrf.mxu0
    %v1068 = vadd.f32 %v814, %v1067
    %1069 = vmatprep.mubr.bf16.mxu0 %v754
    %1070 = vmatmul.mubr.bf16.gmra.mxu0 %v753
    %v1071 = vpop.f32.mrf.mxu0
    %v1072 = vadd.f32 %v810, %v1071
    %v1073 = vpop.f32.mrf.mxu0
    %v1074 = vadd.f32 %v814, %v1073
    %v1075 = vpop.f32.mrf.mxu0
    %v1076 = vadd.f32 %v810, %v1075
    %v1077 = vpop.f32.mrf.mxu0
    %v1078 = vadd.f32 %v814, %v1077
    %1079 = vmatprep.mubr.bf16.mxu0 %v756
    %1080 = vmatmul.mubr.bf16.gmra.mxu0 %v755
    %v1081 = vpop.f32.mrf.mxu0
    %v1082 = vadd.f32 %v810, %v1081
    %v1083 = vpop.f32.mrf.mxu0
    %v1084 = vadd.f32 %v814, %v1083
    %v1085 = vpop.f32.mrf.mxu0
    %v1086 = vadd.f32 %v810, %v1085
    %v1087 = vpop.f32.mrf.mxu0
    %v1088 = vadd.f32 %v814, %v1087
    %1089 = vmatprep.mubr.bf16.mxu0 %v758
    %1090 = vmatmul.mubr.bf16.gmra.mxu0 %v757
    %v1091 = vpop.f32.mrf.mxu0
    %v1092 = vadd.f32 %v810, %v1091
    %v1093 = vpop.f32.mrf.mxu0
    %v1094 = vadd.f32 %v814, %v1093
    %v1095 = vpop.f32.mrf.mxu0
    %v1096 = vadd.f32 %v810, %v1095
    %v1097 = vpop.f32.mrf.mxu0
    %v1098 = vadd.f32 %v814, %v1097
    %1099 = vmatprep.mubr.bf16.mxu0 %v760
    %1100 = vmatmul.mubr.bf16.gmra.mxu0 %v759
    %v1101 = vpop.f32.mrf.mxu0
    %v1102 = vadd.f32 %v810, %v1101
    %v1103 = vpop.f32.mrf.mxu0
    %v1104 = vadd.f32 %v814, %v1103
    %v1105 = vpop.f32.mrf.mxu0
    %v1106 = vadd.f32 %v810, %v1105
    %v1107 = vpop.f32.mrf.mxu0
    %v1108 = vadd.f32 %v814, %v1107
    %1109 = vmatprep.mubr.bf16.mxu0 %v762
    %1110 = vmatmul.mubr.bf16.gmra.mxu0 %v761
    %v1111 = vpop.f32.mrf.mxu0
    %v1112 = vadd.f32 %v810, %v1111
    %v1113 = vpop.f32.mrf.mxu0
    %v1114 = vadd.f32 %v814, %v1113
    %v1115 = vpop.f32.mrf.mxu0
    %v1116 = vadd.f32 %v810, %v1115
    %v1117 = vpop.f32.mrf.mxu0
    %v1118 = vadd.f32 %v814, %v1117
    %1119 = vmatprep.mubr.bf16.mxu0 %v764
    %1120 = vmatmul.mubr.bf16.gmra.mxu0 %v763
    %v1121 = vpop.f32.mrf.mxu0
    %v1122 = vadd.f32 %v810, %v1121
    %v1123 = vpop.f32.mrf.mxu0
    %v1124 = vadd.f32 %v814, %v1123
    %v1125 = vpop.f32.mrf.mxu0
    %v1126 = vadd.f32 %v810, %v1125
    %v1127 = vpop.f32.mrf.mxu0
    %v1128 = vadd.f32 %v814, %v1127
    %1129 = vmatprep.mubr.bf16.mxu0 %v766
    %1130 = vmatmul.mubr.bf16.gmra.mxu0 %v765
    %v1131 = vpop.f32.mrf.mxu0
    %v1132 = vadd.f32 %v810, %v1131
    %v1133 = vpop.f32.mrf.mxu0
    %v1134 = vadd.f32 %v814, %v1133
    %v1135 = vpop.f32.mrf.mxu0
    %v1136 = vadd.f32 %v810, %v1135
    %v1137 = vpop.f32.mrf.mxu0
    %v1138 = vadd.f32 %v814, %v1137
    %1139 = vmatprep.mubr.bf16.mxu0 %v768
    %1140 = vmatmul.mubr.bf16.gmra.mxu0 %v767
    %v1141 = vpop.f32.mrf.mxu0
    %v1142 = vadd.f32 %v810, %v1141
    %v1143 = vpop.f32.mrf.mxu0
    %v1144 = vadd.f32 %v814, %v1143
    %v1145 = vpop.f32.mrf.mxu0
    %v1146 = vadd.f32 %v810, %v1145
    %v1147 = vpop.f32.mrf.mxu0
    %v1148 = vadd.f32 %v814, %v1147
    %1149 = vmatprep.mubr.bf16.mxu0 %v770
    %1150 = vmatmul.mubr.bf16.gmra.mxu0 %v769
    %v1151 = vpop.f32.mrf.mxu0
    %v1152 = vadd.f32 %v810, %v1151
    %v1153 = vpop.f32.mrf.mxu0
    %v1154 = vadd.f32 %v814, %v1153
    %v1155 = vpop.f32.mrf.mxu0
    %v1156 = vadd.f32 %v810, %v1155
    %v1157 = vpop.f32.mrf.mxu0
    %v1158 = vadd.f32 %v814, %v1157
    %1159 = vmatprep.mubr.bf16.mxu0 %v772
    %1160 = vmatmul.mubr.bf16.gmra.mxu0 %v771
    %v1161 = vpop.f32.mrf.mxu0
    %v1162 = vadd.f32 %v810, %v1161
    %v1163 = vpop.f32.mrf.mxu0
    %v1164 = vadd.f32 %v814, %v1163
    %v1165 = vpop.f32.mrf.mxu0
    %v1166 = vadd.f32 %v810, %v1165
    %v1167 = vpop.f32.mrf.mxu0
    %v1168 = vadd.f32 %v814, %v1167
    %1169 = vdwg.mxu0
    %v1170 = vmax.f32 %v1012, 0.0
    %v1171 = vmax.f32 %v1014, 0.0
    %v1172 = vmax.f32 %v1016, 0.0
    %v1173 = vmax.f32 %v1018, 0.0
    %v1174 = vmax.f32 %v1022, 0.0
    %v1175 = vmax.f32 %v1024, 0.0
    %v1176 = vmax.f32 %v1026, 0.0
    %v1177 = vmax.f32 %v1028, 0.0
    %v1178 = vmax.f32 %v1032, 0.0
    %v1179 = vmax.f32 %v1034, 0.0
    %v1180 = vmax.f32 %v1036, 0.0
    %v1181 = vmax.f32 %v1038, 0.0
    %v1182 = vmax.f32 %v1042, 0.0
    %v1183 = vmax.f32 %v1044, 0.0
    %v1184 = vmax.f32 %v1046, 0.0
    %v1185 = vmax.f32 %v1048, 0.0
    %v1186 = vmax.f32 %v1052, 0.0
    %v1187 = vmax.f32 %v1054, 0.0
    %v1188 = vmax.f32 %v1056, 0.0
    %v1189 = vmax.f32 %v1058, 0.0
    %v1190 = vmax.f32 %v1062, 0.0
    %v1191 = vmax.f32 %v1064, 0.0
    %v1192 = vmax.f32 %v1066, 0.0
    %v1193 = vmax.f32 %v1068, 0.0
    %v1194 = vmax.f32 %v1072, 0.0
    %v1195 = vmax.f32 %v1074, 0.0
    %v1196 = vmax.f32 %v1076, 0.0
    %v1197 = vmax.f32 %v1078, 0.0
    %v1198 = vmax.f32 %v1082, 0.0
    %v1199 = vmax.f32 %v1084, 0.0
    %v1200 = vmax.f32 %v1086, 0.0
    %v1201 = vmax.f32 %v1088, 0.0
    %v1202 = vmax.f32 %v1092, 0.0
    %v1203 = vmax.f32 %v1094, 0.0
    %v1204 = vmax.f32 %v1096, 0.0
    %v1205 = vmax.f32 %v1098, 0.0
    %v1206 = vmax.f32 %v1102, 0.0
    %v1207 = vmax.f32 %v1104, 0.0
    %v1208 = vmax.f32 %v1106, 0.0
    %v1209 = vmax.f32 %v1108, 0.0
    %v1210 = vmax.f32 %v1112, 0.0
    %v1211 = vmax.f32 %v1114, 0.0
    %v1212 = vmax.f32 %v1116, 0.0
    %v1213 = vmax.f32 %v1118, 0.0
    %v1214 = vmax.f32 %v1122, 0.0
    %v1215 = vmax.f32 %v1124, 0.0
    %v1216 = vmax.f32 %v1126, 0.0
    %v1217 = vmax.f32 %v1128, 0.0
    %v1218 = vmax.f32 %v1132, 0.0
    %v1219 = vmax.f32 %v1134, 0.0
    %v1220 = vmax.f32 %v1136, 0.0
    %v1221 = vmax.f32 %v1138, 0.0
    %v1222 = vmax.f32 %v1142, 0.0
    %v1223 = vmax.f32 %v1144, 0.0
    %v1224 = vmax.f32 %v1146, 0.0
    %v1225 = vmax.f32 %v1148, 0.0
    %v1226 = vmax.f32 %v1152, 0.0
    %v1227 = vmax.f32 %v1154, 0.0
    %v1228 = vmax.f32 %v1156, 0.0
    %v1229 = vmax.f32 %v1158, 0.0
    %v1230 = vmax.f32 %v1162, 0.0
    %v1231 = vmax.f32 %v1164, 0.0
    %v1232 = vmax.f32 %v1166, 0.0
    %v1233 = vmax.f32 %v1168, 0.0
    %v1234 = vld [vmem:[%s5] ss:$2 sm:$0x3]
    %v1236 = vlaneseq
    %v1237 = vshrl.u32 %v1236, 7
    %v1238 = vsub.s32 0, %v1237
    %v1239 = vrot.slane %v1234, %v1238
    %v1240 = vlaneseq
    %v1241 = vshrl.u32 %v1240, 7
    %v1242 = vsub.s32 1, %v1241
    %v1243 = vrot.slane %v1234, %v1242
    %v1246 = vmul.f32 %v1170, %v1239
    %v1247 = vmul.f32 %v1171, %v1243
    %v1248 = vmul.f32 %v1172, %v1239
    %v1249 = vmul.f32 %v1173, %v1243
    %v1250 = vmul.f32 %v1174, %v1239
    %v1251 = vmul.f32 %v1175, %v1243
    %v1252 = vmul.f32 %v1176, %v1239
    %v1253 = vmul.f32 %v1177, %v1243
    %v1254 = vmul.f32 %v1178, %v1239
    %v1255 = vmul.f32 %v1179, %v1243
    %v1256 = vmul.f32 %v1180, %v1239
    %v1257 = vmul.f32 %v1181, %v1243
    %v1258 = vmul.f32 %v1182, %v1239
    %v1259 = vmul.f32 %v1183, %v1243
    %v1260 = vmul.f32 %v1184, %v1239
    %v1261 = vmul.f32 %v1185, %v1243
    %v1262 = vmul.f32 %v1186, %v1239
    %v1263 = vmul.f32 %v1187, %v1243
    %v1264 = vmul.f32 %v1188, %v1239
    %v1265 = vmul.f32 %v1189, %v1243
    %v1266 = vmul.f32 %v1190, %v1239
    %v1267 = vmul.f32 %v1191, %v1243
    %v1268 = vmul.f32 %v1192, %v1239
    %v1269 = vmul.f32 %v1193, %v1243
    %v1270 = vmul.f32 %v1194, %v1239
    %v1271 = vmul.f32 %v1195, %v1243
    %v1272 = vmul.f32 %v1196, %v1239
    %v1273 = vmul.f32 %v1197, %v1243
    %v1274 = vmul.f32 %v1198, %v1239
    %v1275 = vmul.f32 %v1199, %v1243
    %v1276 = vmul.f32 %v1200, %v1239
    %v1277 = vmul.f32 %v1201, %v1243
    %v1278 = vmul.f32 %v1202, %v1239
    %v1279 = vmul.f32 %v1203, %v1243
    %v1280 = vmul.f32 %v1204, %v1239
    %v1281 = vmul.f32 %v1205, %v1243
    %v1282 = vmul.f32 %v1206, %v1239
    %v1283 = vmul.f32 %v1207, %v1243
    %v1284 = vmul.f32 %v1208, %v1239
    %v1285 = vmul.f32 %v1209, %v1243
    %v1286 = vmul.f32 %v1210, %v1239
    %v1287 = vmul.f32 %v1211, %v1243
    %v1288 = vmul.f32 %v1212, %v1239
    %v1289 = vmul.f32 %v1213, %v1243
    %v1290 = vmul.f32 %v1214, %v1239
    %v1291 = vmul.f32 %v1215, %v1243
    %v1292 = vmul.f32 %v1216, %v1239
    %v1293 = vmul.f32 %v1217, %v1243
    %v1294 = vmul.f32 %v1218, %v1239
    %v1295 = vmul.f32 %v1219, %v1243
    %v1296 = vmul.f32 %v1220, %v1239
    %v1297 = vmul.f32 %v1221, %v1243
    %v1298 = vmul.f32 %v1222, %v1239
    %v1299 = vmul.f32 %v1223, %v1243
    %v1300 = vmul.f32 %v1224, %v1239
    %v1301 = vmul.f32 %v1225, %v1243
    %v1302 = vmul.f32 %v1226, %v1239
    %v1303 = vmul.f32 %v1227, %v1243
    %v1304 = vmul.f32 %v1228, %v1239
    %v1305 = vmul.f32 %v1229, %v1243
    %v1306 = vmul.f32 %v1230, %v1239
    %v1307 = vmul.f32 %v1231, %v1243
    %v1308 = vmul.f32 %v1232, %v1239
    %v1309 = vmul.f32 %v1233, %v1243
    %v1310 = vadd.f32 %v1246, %v1247
    %1311 = vadd.xlane.f32.xlu0 %v1310
    %v1312 = vpop.xlane.xlu0 %1311
    %v1313 = vadd.f32 %v1248, %v1249
    %1314 = vadd.xlane.f32.xlu0 %v1313
    %v1315 = vpop.xlane.xlu0 %1314
    %v1316 = vadd.f32 %v1250, %v1251
    %1317 = vadd.xlane.f32.xlu0 %v1316
    %v1318 = vpop.xlane.xlu0 %1317
    %v1319 = vadd.f32 %v1252, %v1253
    %1320 = vadd.xlane.f32.xlu0 %v1319
    %v1321 = vpop.xlane.xlu0 %1320
    %v1322 = vadd.f32 %v1254, %v1255
    %1323 = vadd.xlane.f32.xlu0 %v1322
    %v1324 = vpop.xlane.xlu0 %1323
    %v1325 = vadd.f32 %v1256, %v1257
    %1326 = vadd.xlane.f32.xlu0 %v1325
    %v1327 = vpop.xlane.xlu0 %1326
    %v1328 = vadd.f32 %v1258, %v1259
    %1329 = vadd.xlane.f32.xlu0 %v1328
    %v1330 = vpop.xlane.xlu0 %1329
    %v1331 = vadd.f32 %v1260, %v1261
    %1332 = vadd.xlane.f32.xlu0 %v1331
    %v1333 = vpop.xlane.xlu0 %1332
    %v1334 = vadd.f32 %v1262, %v1263
    %1335 = vadd.xlane.f32.xlu0 %v1334
    %v1336 = vpop.xlane.xlu0 %1335
    %v1337 = vadd.f32 %v1264, %v1265
    %1338 = vadd.xlane.f32.xlu0 %v1337
    %v1339 = vpop.xlane.xlu0 %1338
    %v1340 = vadd.f32 %v1266, %v1267
    %1341 = vadd.xlane.f32.xlu0 %v1340
    %v1342 = vpop.xlane.xlu0 %1341
    %v1343 = vadd.f32 %v1268, %v1269
    %1344 = vadd.xlane.f32.xlu0 %v1343
    %v1345 = vpop.xlane.xlu0 %1344
    %v1346 = vadd.f32 %v1270, %v1271
    %1347 = vadd.xlane.f32.xlu0 %v1346
    %v1348 = vpop.xlane.xlu0 %1347
    %v1349 = vadd.f32 %v1272, %v1273
    %1350 = vadd.xlane.f32.xlu0 %v1349
    %v1351 = vpop.xlane.xlu0 %1350
    %v1352 = vadd.f32 %v1274, %v1275
    %1353 = vadd.xlane.f32.xlu0 %v1352
    %v1354 = vpop.xlane.xlu0 %1353
    %v1355 = vadd.f32 %v1276, %v1277
    %1356 = vadd.xlane.f32.xlu0 %v1355
    %v1357 = vpop.xlane.xlu0 %1356
    %v1358 = vadd.f32 %v1278, %v1279
    %1359 = vadd.xlane.f32.xlu0 %v1358
    %v1360 = vpop.xlane.xlu0 %1359
    %v1361 = vadd.f32 %v1280, %v1281
    %1362 = vadd.xlane.f32.xlu0 %v1361
    %v1363 = vpop.xlane.xlu0 %1362
    %v1364 = vadd.f32 %v1282, %v1283
    %1365 = vadd.xlane.f32.xlu0 %v1364
    %v1366 = vpop.xlane.xlu0 %1365
    %v1367 = vadd.f32 %v1284, %v1285
    %1368 = vadd.xlane.f32.xlu0 %v1367
    %v1369 = vpop.xlane.xlu0 %1368
    %v1370 = vadd.f32 %v1286, %v1287
    %1371 = vadd.xlane.f32.xlu0 %v1370
    %v1372 = vpop.xlane.xlu0 %1371
    %v1373 = vadd.f32 %v1288, %v1289
    %1374 = vadd.xlane.f32.xlu0 %v1373
    %v1375 = vpop.xlane.xlu0 %1374
    %v1376 = vadd.f32 %v1290, %v1291
    %1377 = vadd.xlane.f32.xlu0 %v1376
    %v1378 = vpop.xlane.xlu0 %1377
    %v1379 = vadd.f32 %v1292, %v1293
    %1380 = vadd.xlane.f32.xlu0 %v1379
    %v1381 = vpop.xlane.xlu0 %1380
    %v1382 = vadd.f32 %v1294, %v1295
    %1383 = vadd.xlane.f32.xlu0 %v1382
    %v1384 = vpop.xlane.xlu0 %1383
    %v1385 = vadd.f32 %v1296, %v1297
    %1386 = vadd.xlane.f32.xlu0 %v1385
    %v1387 = vpop.xlane.xlu0 %1386
    %v1388 = vadd.f32 %v1298, %v1299
    %1389 = vadd.xlane.f32.xlu0 %v1388
    %v1390 = vpop.xlane.xlu0 %1389
    %v1391 = vadd.f32 %v1300, %v1301
    %1392 = vadd.xlane.f32.xlu0 %v1391
    %v1393 = vpop.xlane.xlu0 %1392
    %v1394 = vadd.f32 %v1302, %v1303
    %1395 = vadd.xlane.f32.xlu0 %v1394
    %v1396 = vpop.xlane.xlu0 %1395
    %v1397 = vadd.f32 %v1304, %v1305
    %1398 = vadd.xlane.f32.xlu0 %v1397
    %v1399 = vpop.xlane.xlu0 %1398
    %v1400 = vadd.f32 %v1306, %v1307
    %1401 = vadd.xlane.f32.xlu0 %v1400
    %v1402 = vpop.xlane.xlu0 %1401
    %v1403 = vadd.f32 %v1308, %v1309
    %1404 = vadd.xlane.f32.xlu0 %v1403
    %v1405 = vpop.xlane.xlu0 %1404
    %s1406 = sld [smem:[#allocation5]]
    %v1407 = vstv %s1406
    %v1408 = vadd.f32 %v1312, %v1407
    %v1409 = vadd.f32 %v1315, %v1407
    %v1410 = vadd.f32 %v1318, %v1407
    %v1411 = vadd.f32 %v1321, %v1407
    %v1412 = vadd.f32 %v1324, %v1407
    %v1413 = vadd.f32 %v1327, %v1407
    %v1414 = vadd.f32 %v1330, %v1407
    %v1415 = vadd.f32 %v1333, %v1407
    %v1416 = vadd.f32 %v1336, %v1407
    %v1417 = vadd.f32 %v1339, %v1407
    %v1418 = vadd.f32 %v1342, %v1407
    %v1419 = vadd.f32 %v1345, %v1407
    %v1420 = vadd.f32 %v1348, %v1407
    %v1421 = vadd.f32 %v1351, %v1407
    %v1422 = vadd.f32 %v1354, %v1407
    %v1423 = vadd.f32 %v1357, %v1407
    %v1424 = vadd.f32 %v1360, %v1407
    %v1425 = vadd.f32 %v1363, %v1407
    %v1426 = vadd.f32 %v1366, %v1407
    %v1427 = vadd.f32 %v1369, %v1407
    %v1428 = vadd.f32 %v1372, %v1407
    %v1429 = vadd.f32 %v1375, %v1407
    %v1430 = vadd.f32 %v1378, %v1407
    %v1431 = vadd.f32 %v1381, %v1407
    %v1432 = vadd.f32 %v1384, %v1407
    %v1433 = vadd.f32 %v1387, %v1407
    %v1434 = vadd.f32 %v1390, %v1407
    %v1435 = vadd.f32 %v1393, %v1407
    %v1436 = vadd.f32 %v1396, %v1407
    %v1437 = vadd.f32 %v1399, %v1407
    %v1438 = vadd.f32 %v1402, %v1407
    %v1439 = vadd.f32 %v1405, %v1407
    %v1440 = vtanh.pop %v1408
    %v1441 = vtanh.pop %v1409
    %v1442 = vtanh.pop %v1410
    %v1443 = vtanh.pop %v1411
    %v1444 = vtanh.pop %v1412
    %v1445 = vtanh.pop %v1413
    %v1446 = vtanh.pop %v1414
    %v1447 = vtanh.pop %v1415
    %v1448 = vtanh.pop %v1416
    %v1449 = vtanh.pop %v1417
    %v1450 = vtanh.pop %v1418
    %v1451 = vtanh.pop %v1419
    %v1452 = vtanh.pop %v1420
    %v1453 = vtanh.pop %v1421
    %v1454 = vtanh.pop %v1422
    %v1455 = vtanh.pop %v1423
    %v1456 = vtanh.pop %v1424
    %v1457 = vtanh.pop %v1425
    %v1458 = vtanh.pop %v1426
    %v1459 = vtanh.pop %v1427
    %v1460 = vtanh.pop %v1428
    %v1461 = vtanh.pop %v1429
    %v1462 = vtanh.pop %v1430
    %v1463 = vtanh.pop %v1431
    %v1464 = vtanh.pop %v1432
    %v1465 = vtanh.pop %v1433
    %v1466 = vtanh.pop %v1434
    %v1467 = vtanh.pop %v1435
    %v1468 = vtanh.pop %v1436
    %v1469 = vtanh.pop %v1437
    %v1470 = vtanh.pop %v1438
    %v1471 = vtanh.pop %v1439
    %s1472 = scalar_lea.vmem %s5, 1
    %v1473 = vld [vmem:[%s1472] ss:$2 sm:$0x3]
    %v1475 = vlaneseq
    %v1476 = vshrl.u32 %v1475, 7
    %v1477 = vsub.s32 0, %v1476
    %v1478 = vrot.slane %v1473, %v1477
    %v1479 = vlaneseq
    %v1480 = vshrl.u32 %v1479, 7
    %v1481 = vsub.s32 1, %v1480
    %v1482 = vrot.slane %v1473, %v1481
    %v1485 = vmul.f32 %v1170, %v1478
    %v1486 = vmul.f32 %v1171, %v1482
    %v1487 = vmul.f32 %v1172, %v1478
    %v1488 = vmul.f32 %v1173, %v1482
    %v1489 = vmul.f32 %v1174, %v1478
    %v1490 = vmul.f32 %v1175, %v1482
    %v1491 = vmul.f32 %v1176, %v1478
    %v1492 = vmul.f32 %v1177, %v1482
    %v1493 = vmul.f32 %v1178, %v1478
    %v1494 = vmul.f32 %v1179, %v1482
    %v1495 = vmul.f32 %v1180, %v1478
    %v1496 = vmul.f32 %v1181, %v1482
    %v1497 = vmul.f32 %v1182, %v1478
    %v1498 = vmul.f32 %v1183, %v1482
    %v1499 = vmul.f32 %v1184, %v1478
    %v1500 = vmul.f32 %v1185, %v1482
    %v1501 = vmul.f32 %v1186, %v1478
    %v1502 = vmul.f32 %v1187, %v1482
    %v1503 = vmul.f32 %v1188, %v1478
    %v1504 = vmul.f32 %v1189, %v1482
    %v1505 = vmul.f32 %v1190, %v1478
    %v1506 = vmul.f32 %v1191, %v1482
    %v1507 = vmul.f32 %v1192, %v1478
    %v1508 = vmul.f32 %v1193, %v1482
    %v1509 = vmul.f32 %v1194, %v1478
    %v1510 = vmul.f32 %v1195, %v1482
    %v1511 = vmul.f32 %v1196, %v1478
    %v1512 = vmul.f32 %v1197, %v1482
    %v1513 = vmul.f32 %v1198, %v1478
    %v1514 = vmul.f32 %v1199, %v1482
    %v1515 = vmul.f32 %v1200, %v1478
    %v1516 = vmul.f32 %v1201, %v1482
    %v1517 = vmul.f32 %v1202, %v1478
    %v1518 = vmul.f32 %v1203, %v1482
    %v1519 = vmul.f32 %v1204, %v1478
    %v1520 = vmul.f32 %v1205, %v1482
    %v1521 = vmul.f32 %v1206, %v1478
    %v1522 = vmul.f32 %v1207, %v1482
    %v1523 = vmul.f32 %v1208, %v1478
    %v1524 = vmul.f32 %v1209, %v1482
    %v1525 = vmul.f32 %v1210, %v1478
    %v1526 = vmul.f32 %v1211, %v1482
    %v1527 = vmul.f32 %v1212, %v1478
    %v1528 = vmul.f32 %v1213, %v1482
    %v1529 = vmul.f32 %v1214, %v1478
    %v1530 = vmul.f32 %v1215, %v1482
    %v1531 = vmul.f32 %v1216, %v1478
    %v1532 = vmul.f32 %v1217, %v1482
    %v1533 = vmul.f32 %v1218, %v1478
    %v1534 = vmul.f32 %v1219, %v1482
    %v1535 = vmul.f32 %v1220, %v1478
    %v1536 = vmul.f32 %v1221, %v1482
    %v1537 = vmul.f32 %v1222, %v1478
    %v1538 = vmul.f32 %v1223, %v1482
    %v1539 = vmul.f32 %v1224, %v1478
    %v1540 = vmul.f32 %v1225, %v1482
    %v1541 = vmul.f32 %v1226, %v1478
    %v1542 = vmul.f32 %v1227, %v1482
    %v1543 = vmul.f32 %v1228, %v1478
    %v1544 = vmul.f32 %v1229, %v1482
    %v1545 = vmul.f32 %v1230, %v1478
    %v1546 = vmul.f32 %v1231, %v1482
    %v1547 = vmul.f32 %v1232, %v1478
    %v1548 = vmul.f32 %v1233, %v1482
    %v1549 = vadd.f32 %v1485, %v1486
    %1550 = vadd.xlane.f32.xlu0 %v1549
    %v1551 = vpop.xlane.xlu0 %1550
    %v1552 = vadd.f32 %v1487, %v1488
    %1553 = vadd.xlane.f32.xlu0 %v1552
    %v1554 = vpop.xlane.xlu0 %1553
    %v1555 = vadd.f32 %v1489, %v1490
    %1556 = vadd.xlane.f32.xlu0 %v1555
    %v1557 = vpop.xlane.xlu0 %1556
    %v1558 = vadd.f32 %v1491, %v1492
    %1559 = vadd.xlane.f32.xlu0 %v1558
    %v1560 = vpop.xlane.xlu0 %1559
    %v1561 = vadd.f32 %v1493, %v1494
    %1562 = vadd.xlane.f32.xlu0 %v1561
    %v1563 = vpop.xlane.xlu0 %1562
    %v1564 = vadd.f32 %v1495, %v1496
    %1565 = vadd.xlane.f32.xlu0 %v1564
    %v1566 = vpop.xlane.xlu0 %1565
    %v1567 = vadd.f32 %v1497, %v1498
    %1568 = vadd.xlane.f32.xlu0 %v1567
    %v1569 = vpop.xlane.xlu0 %1568
    %v1570 = vadd.f32 %v1499, %v1500
    %1571 = vadd.xlane.f32.xlu0 %v1570
    %v1572 = vpop.xlane.xlu0 %1571
    %v1573 = vadd.f32 %v1501, %v1502
    %1574 = vadd.xlane.f32.xlu0 %v1573
    %v1575 = vpop.xlane.xlu0 %1574
    %v1576 = vadd.f32 %v1503, %v1504
    %1577 = vadd.xlane.f32.xlu0 %v1576
    %v1578 = vpop.xlane.xlu0 %1577
    %v1579 = vadd.f32 %v1505, %v1506
    %1580 = vadd.xlane.f32.xlu0 %v1579
    %v1581 = vpop.xlane.xlu0 %1580
    %v1582 = vadd.f32 %v1507, %v1508
    %1583 = vadd.xlane.f32.xlu0 %v1582
    %v1584 = vpop.xlane.xlu0 %1583
    %v1585 = vadd.f32 %v1509, %v1510
    %1586 = vadd.xlane.f32.xlu0 %v1585
    %v1587 = vpop.xlane.xlu0 %1586
    %v1588 = vadd.f32 %v1511, %v1512
    %1589 = vadd.xlane.f32.xlu0 %v1588
    %v1590 = vpop.xlane.xlu0 %1589
    %v1591 = vadd.f32 %v1513, %v1514
    %1592 = vadd.xlane.f32.xlu0 %v1591
    %v1593 = vpop.xlane.xlu0 %1592
    %v1594 = vadd.f32 %v1515, %v1516
    %1595 = vadd.xlane.f32.xlu0 %v1594
    %v1596 = vpop.xlane.xlu0 %1595
    %v1597 = vadd.f32 %v1517, %v1518
    %1598 = vadd.xlane.f32.xlu0 %v1597
    %v1599 = vpop.xlane.xlu0 %1598
    %v1600 = vadd.f32 %v1519, %v1520
    %1601 = vadd.xlane.f32.xlu0 %v1600
    %v1602 = vpop.xlane.xlu0 %1601
    %v1603 = vadd.f32 %v1521, %v1522
    %1604 = vadd.xlane.f32.xlu0 %v1603
    %v1605 = vpop.xlane.xlu0 %1604
    %v1606 = vadd.f32 %v1523, %v1524
    %1607 = vadd.xlane.f32.xlu0 %v1606
    %v1608 = vpop.xlane.xlu0 %1607
    %v1609 = vadd.f32 %v1525, %v1526
    %1610 = vadd.xlane.f32.xlu0 %v1609
    %v1611 = vpop.xlane.xlu0 %1610
    %v1612 = vadd.f32 %v1527, %v1528
    %1613 = vadd.xlane.f32.xlu0 %v1612
    %v1614 = vpop.xlane.xlu0 %1613
    %v1615 = vadd.f32 %v1529, %v1530
    %1616 = vadd.xlane.f32.xlu0 %v1615
    %v1617 = vpop.xlane.xlu0 %1616
    %v1618 = vadd.f32 %v1531, %v1532
    %1619 = vadd.xlane.f32.xlu0 %v1618
    %v1620 = vpop.xlane.xlu0 %1619
    %v1621 = vadd.f32 %v1533, %v1534
    %1622 = vadd.xlane.f32.xlu0 %v1621
    %v1623 = vpop.xlane.xlu0 %1622
    %v1624 = vadd.f32 %v1535, %v1536
    %1625 = vadd.xlane.f32.xlu0 %v1624
    %v1626 = vpop.xlane.xlu0 %1625
    %v1627 = vadd.f32 %v1537, %v1538
    %1628 = vadd.xlane.f32.xlu0 %v1627
    %v1629 = vpop.xlane.xlu0 %1628
    %v1630 = vadd.f32 %v1539, %v1540
    %1631 = vadd.xlane.f32.xlu0 %v1630
    %v1632 = vpop.xlane.xlu0 %1631
    %v1633 = vadd.f32 %v1541, %v1542
    %1634 = vadd.xlane.f32.xlu0 %v1633
    %v1635 = vpop.xlane.xlu0 %1634
    %v1636 = vadd.f32 %v1543, %v1544
    %1637 = vadd.xlane.f32.xlu0 %v1636
    %v1638 = vpop.xlane.xlu0 %1637
    %v1639 = vadd.f32 %v1545, %v1546
    %1640 = vadd.xlane.f32.xlu0 %v1639
    %v1641 = vpop.xlane.xlu0 %1640
    %v1642 = vadd.f32 %v1547, %v1548
    %1643 = vadd.xlane.f32.xlu0 %v1642
    %v1644 = vpop.xlane.xlu0 %1643
    %s1645 = sld [smem:[#allocation5 + $0x1]]
    %v1646 = vstv %s1645
    %v1647 = vadd.f32 %v1551, %v1646
    %v1648 = vadd.f32 %v1554, %v1646
    %v1649 = vadd.f32 %v1557, %v1646
    %v1650 = vadd.f32 %v1560, %v1646
    %v1651 = vadd.f32 %v1563, %v1646
    %v1652 = vadd.f32 %v1566, %v1646
    %v1653 = vadd.f32 %v1569, %v1646
    %v1654 = vadd.f32 %v1572, %v1646
    %v1655 = vadd.f32 %v1575, %v1646
    %v1656 = vadd.f32 %v1578, %v1646
    %v1657 = vadd.f32 %v1581, %v1646
    %v1658 = vadd.f32 %v1584, %v1646
    %v1659 = vadd.f32 %v1587, %v1646
    %v1660 = vadd.f32 %v1590, %v1646
    %v1661 = vadd.f32 %v1593, %v1646
    %v1662 = vadd.f32 %v1596, %v1646
    %v1663 = vadd.f32 %v1599, %v1646
    %v1664 = vadd.f32 %v1602, %v1646
    %v1665 = vadd.f32 %v1605, %v1646
    %v1666 = vadd.f32 %v1608, %v1646
    %v1667 = vadd.f32 %v1611, %v1646
    %v1668 = vadd.f32 %v1614, %v1646
    %v1669 = vadd.f32 %v1617, %v1646
    %v1670 = vadd.f32 %v1620, %v1646
    %v1671 = vadd.f32 %v1623, %v1646
    %v1672 = vadd.f32 %v1626, %v1646
    %v1673 = vadd.f32 %v1629, %v1646
    %v1674 = vadd.f32 %v1632, %v1646
    %v1675 = vadd.f32 %v1635, %v1646
    %v1676 = vadd.f32 %v1638, %v1646
    %v1677 = vadd.f32 %v1641, %v1646
    %v1678 = vadd.f32 %v1644, %v1646
    %v1679 = vmax.f32 %v1647, 0.0
    %v1680 = vmax.f32 %v1648, 0.0
    %v1681 = vmax.f32 %v1649, 0.0
    %v1682 = vmax.f32 %v1650, 0.0
    %v1683 = vmax.f32 %v1651, 0.0
    %v1684 = vmax.f32 %v1652, 0.0
    %v1685 = vmax.f32 %v1653, 0.0
    %v1686 = vmax.f32 %v1654, 0.0
    %v1687 = vmax.f32 %v1655, 0.0
    %v1688 = vmax.f32 %v1656, 0.0
    %v1689 = vmax.f32 %v1657, 0.0
    %v1690 = vmax.f32 %v1658, 0.0
    %v1691 = vmax.f32 %v1659, 0.0
    %v1692 = vmax.f32 %v1660, 0.0
    %v1693 = vmax.f32 %v1661, 0.0
    %v1694 = vmax.f32 %v1662, 0.0
    %v1695 = vmax.f32 %v1663, 0.0
    %v1696 = vmax.f32 %v1664, 0.0
    %v1697 = vmax.f32 %v1665, 0.0
    %v1698 = vmax.f32 %v1666, 0.0
    %v1699 = vmax.f32 %v1667, 0.0
    %v1700 = vmax.f32 %v1668, 0.0
    %v1701 = vmax.f32 %v1669, 0.0
    %v1702 = vmax.f32 %v1670, 0.0
    %v1703 = vmax.f32 %v1671, 0.0
    %v1704 = vmax.f32 %v1672, 0.0
    %v1705 = vmax.f32 %v1673, 0.0
    %v1706 = vmax.f32 %v1674, 0.0
    %v1707 = vmax.f32 %v1675, 0.0
    %v1708 = vmax.f32 %v1676, 0.0
    %v1709 = vmax.f32 %v1677, 0.0
    %v1710 = vmax.f32 %v1678, 0.0
    %v1711 = vand.u32 2147483647, %v1647
    %v1712 = vand.u32 2147483647, %v1648
    %v1713 = vand.u32 2147483647, %v1649
    %v1714 = vand.u32 2147483647, %v1650
    %v1715 = vand.u32 2147483647, %v1651
    %v1716 = vand.u32 2147483647, %v1652
    %v1717 = vand.u32 2147483647, %v1653
    %v1718 = vand.u32 2147483647, %v1654
    %v1719 = vand.u32 2147483647, %v1655
    %v1720 = vand.u32 2147483647, %v1656
    %v1721 = vand.u32 2147483647, %v1657
    %v1722 = vand.u32 2147483647, %v1658
    %v1723 = vand.u32 2147483647, %v1659
    %v1724 = vand.u32 2147483647, %v1660
    %v1725 = vand.u32 2147483647, %v1661
    %v1726 = vand.u32 2147483647, %v1662
    %v1727 = vand.u32 2147483647, %v1663
    %v1728 = vand.u32 2147483647, %v1664
    %v1729 = vand.u32 2147483647, %v1665
    %v1730 = vand.u32 2147483647, %v1666
    %v1731 = vand.u32 2147483647, %v1667
    %v1732 = vand.u32 2147483647, %v1668
    %v1733 = vand.u32 2147483647, %v1669
    %v1734 = vand.u32 2147483647, %v1670
    %v1735 = vand.u32 2147483647, %v1671
    %v1736 = vand.u32 2147483647, %v1672
    %v1737 = vand.u32 2147483647, %v1673
    %v1738 = vand.u32 2147483647, %v1674
    %v1739 = vand.u32 2147483647, %v1675
    %v1740 = vand.u32 2147483647, %v1676
    %v1741 = vand.u32 2147483647, %v1677
    %v1742 = vand.u32 2147483647, %v1678
    %v1743 = vsub.f32 0.0, %v1711
    %v1744 = vsub.f32 0.0, %v1712
    %v1745 = vsub.f32 0.0, %v1713
    %v1746 = vsub.f32 0.0, %v1714
    %v1747 = vsub.f32 0.0, %v1715
    %v1748 = vsub.f32 0.0, %v1716
    %v1749 = vsub.f32 0.0, %v1717
    %v1750 = vsub.f32 0.0, %v1718
    %v1751 = vsub.f32 0.0, %v1719
    %v1752 = vsub.f32 0.0, %v1720
    %v1753 = vsub.f32 0.0, %v1721
    %v1754 = vsub.f32 0.0, %v1722
    %v1755 = vsub.f32 0.0, %v1723
    %v1756 = vsub.f32 0.0, %v1724
    %v1757 = vsub.f32 0.0, %v1725
    %v1758 = vsub.f32 0.0, %v1726
    %v1759 = vsub.f32 0.0, %v1727
    %v1760 = vsub.f32 0.0, %v1728
    %v1761 = vsub.f32 0.0, %v1729
    %v1762 = vsub.f32 0.0, %v1730
    %v1763 = vsub.f32 0.0, %v1731
    %v1764 = vsub.f32 0.0, %v1732
    %v1765 = vsub.f32 0.0, %v1733
    %v1766 = vsub.f32 0.0, %v1734
    %v1767 = vsub.f32 0.0, %v1735
    %v1768 = vsub.f32 0.0, %v1736
    %v1769 = vsub.f32 0.0, %v1737
    %v1770 = vsub.f32 0.0, %v1738
    %v1771 = vsub.f32 0.0, %v1739
    %v1772 = vsub.f32 0.0, %v1740
    %v1773 = vsub.f32 0.0, %v1741
    %v1774 = vsub.f32 0.0, %v1742
    %v1775 = vmul.f32 %v1743, 1.442695
    %v1776 = vpow.pop %v1775
    %v1777 = vmul.f32 %v1744, 1.442695
    %v1778 = vpow.pop %v1777
    %v1779 = vmul.f32 %v1745, 1.442695
    %v1780 = vpow.pop %v1779
    %v1781 = vmul.f32 %v1746, 1.442695
    %v1782 = vpow.pop %v1781
    %v1783 = vmul.f32 %v1747, 1.442695
    %v1784 = vpow.pop %v1783
    %v1785 = vmul.f32 %v1748, 1.442695
    %v1786 = vpow.pop %v1785
    %v1787 = vmul.f32 %v1749, 1.442695
    %v1788 = vpow.pop %v1787
    %v1789 = vmul.f32 %v1750, 1.442695
    %v1790 = vpow.pop %v1789
    %v1791 = vmul.f32 %v1751, 1.442695
    %v1792 = vpow.pop %v1791
    %v1793 = vmul.f32 %v1752, 1.442695
    %v1794 = vpow.pop %v1793
    %v1795 = vmul.f32 %v1753, 1.442695
    %v1796 = vpow.pop %v1795
    %v1797 = vmul.f32 %v1754, 1.442695
    %v1798 = vpow.pop %v1797
    %v1799 = vmul.f32 %v1755, 1.442695
    %v1800 = vpow.pop %v1799
    %v1801 = vmul.f32 %v1756, 1.442695
    %v1802 = vpow.pop %v1801
    %v1803 = vmul.f32 %v1757, 1.442695
    %v1804 = vpow.pop %v1803
    %v1805 = vmul.f32 %v1758, 1.442695
    %v1806 = vpow.pop %v1805
    %v1807 = vmul.f32 %v1759, 1.442695
    %v1808 = vpow.pop %v1807
    %v1809 = vmul.f32 %v1760, 1.442695
    %v1810 = vpow.pop %v1809
    %v1811 = vmul.f32 %v1761, 1.442695
    %v1812 = vpow.pop %v1811
    %v1813 = vmul.f32 %v1762, 1.442695
    %v1814 = vpow.pop %v1813
    %v1815 = vmul.f32 %v1763, 1.442695
    %v1816 = vpow.pop %v1815
    %v1817 = vmul.f32 %v1764, 1.442695
    %v1818 = vpow.pop %v1817
    %v1819 = vmul.f32 %v1765, 1.442695
    %v1820 = vpow.pop %v1819
    %v1821 = vmul.f32 %v1766, 1.442695
    %v1822 = vpow.pop %v1821
    %v1823 = vmul.f32 %v1767, 1.442695
    %v1824 = vpow.pop %v1823
    %v1825 = vmul.f32 %v1768, 1.442695
    %v1826 = vpow.pop %v1825
    %v1827 = vmul.f32 %v1769, 1.442695
    %v1828 = vpow.pop %v1827
    %v1829 = vmul.f32 %v1770, 1.442695
    %v1830 = vpow.pop %v1829
    %v1831 = vmul.f32 %v1771, 1.442695
    %v1832 = vpow.pop %v1831
    %v1833 = vmul.f32 %v1772, 1.442695
    %v1834 = vpow.pop %v1833
    %v1835 = vmul.f32 %v1773, 1.442695
    %v1836 = vpow.pop %v1835
    %v1837 = vmul.f32 %v1774, 1.442695
    %v1838 = vpow.pop %v1837
    %v1839 = vadd.f32 %v1776, 1.0
    %v1840 = vadd.f32 %v1778, 1.0
    %v1841 = vadd.f32 %v1780, 1.0
    %v1842 = vadd.f32 %v1782, 1.0
    %v1843 = vadd.f32 %v1784, 1.0
    %v1844 = vadd.f32 %v1786, 1.0
    %v1845 = vadd.f32 %v1788, 1.0
    %v1846 = vadd.f32 %v1790, 1.0
    %v1847 = vadd.f32 %v1792, 1.0
    %v1848 = vadd.f32 %v1794, 1.0
    %v1849 = vadd.f32 %v1796, 1.0
    %v1850 = vadd.f32 %v1798, 1.0
    %v1851 = vadd.f32 %v1800, 1.0
    %v1852 = vadd.f32 %v1802, 1.0
    %v1853 = vadd.f32 %v1804, 1.0
    %v1854 = vadd.f32 %v1806, 1.0
    %v1855 = vadd.f32 %v1808, 1.0
    %v1856 = vadd.f32 %v1810, 1.0
    %v1857 = vadd.f32 %v1812, 1.0
    %v1858 = vadd.f32 %v1814, 1.0
    %v1859 = vadd.f32 %v1816, 1.0
    %v1860 = vadd.f32 %v1818, 1.0
    %v1861 = vadd.f32 %v1820, 1.0
    %v1862 = vadd.f32 %v1822, 1.0
    %v1863 = vadd.f32 %v1824, 1.0
    %v1864 = vadd.f32 %v1826, 1.0
    %v1865 = vadd.f32 %v1828, 1.0
    %v1866 = vadd.f32 %v1830, 1.0
    %v1867 = vadd.f32 %v1832, 1.0
    %v1868 = vadd.f32 %v1834, 1.0
    %v1869 = vadd.f32 %v1836, 1.0
    %v1870 = vadd.f32 %v1838, 1.0
    %v1871 = vlog2.pop %v1839
    %v1872 = vmul.f32 %v1871, 0.6931472
    %v1873 = vlog2.pop %v1840
    %v1874 = vmul.f32 %v1873, 0.6931472
    %v1875 = vlog2.pop %v1841
    %v1876 = vmul.f32 %v1875, 0.6931472
    %v1877 = vlog2.pop %v1842
    %v1878 = vmul.f32 %v1877, 0.6931472
    %v1879 = vlog2.pop %v1843
    %v1880 = vmul.f32 %v1879, 0.6931472
    %v1881 = vlog2.pop %v1844
    %v1882 = vmul.f32 %v1881, 0.6931472
    %v1883 = vlog2.pop %v1845
    %v1884 = vmul.f32 %v1883, 0.6931472
    %v1885 = vlog2.pop %v1846
    %v1886 = vmul.f32 %v1885, 0.6931472
    %v1887 = vlog2.pop %v1847
    %v1888 = vmul.f32 %v1887, 0.6931472
    %v1889 = vlog2.pop %v1848
    %v1890 = vmul.f32 %v1889, 0.6931472
    %v1891 = vlog2.pop %v1849
    %v1892 = vmul.f32 %v1891, 0.6931472
    %v1893 = vlog2.pop %v1850
    %v1894 = vmul.f32 %v1893, 0.6931472
    %v1895 = vlog2.pop %v1851
    %v1896 = vmul.f32 %v1895, 0.6931472
    %v1897 = vlog2.pop %v1852
    %v1898 = vmul.f32 %v1897, 0.6931472
    %v1899 = vlog2.pop %v1853
    %v1900 = vmul.f32 %v1899, 0.6931472
    %v1901 = vlog2.pop %v1854
    %v1902 = vmul.f32 %v1901, 0.6931472
    %v1903 = vlog2.pop %v1855
    %v1904 = vmul.f32 %v1903, 0.6931472
    %v1905 = vlog2.pop %v1856
    %v1906 = vmul.f32 %v1905, 0.6931472
    %v1907 = vlog2.pop %v1857
    %v1908 = vmul.f32 %v1907, 0.6931472
    %v1909 = vlog2.pop %v1858
    %v1910 = vmul.f32 %v1909, 0.6931472
    %v1911 = vlog2.pop %v1859
    %v1912 = vmul.f32 %v1911, 0.6931472
    %v1913 = vlog2.pop %v1860
    %v1914 = vmul.f32 %v1913, 0.6931472
    %v1915 = vlog2.pop %v1861
    %v1916 = vmul.f32 %v1915, 0.6931472
    %v1917 = vlog2.pop %v1862
    %v1918 = vmul.f32 %v1917, 0.6931472
    %v1919 = vlog2.pop %v1863
    %v1920 = vmul.f32 %v1919, 0.6931472
    %v1921 = vlog2.pop %v1864
    %v1922 = vmul.f32 %v1921, 0.6931472
    %v1923 = vlog2.pop %v1865
    %v1924 = vmul.f32 %v1923, 0.6931472
    %v1925 = vlog2.pop %v1866
    %v1926 = vmul.f32 %v1925, 0.6931472
    %v1927 = vlog2.pop %v1867
    %v1928 = vmul.f32 %v1927, 0.6931472
    %v1929 = vlog2.pop %v1868
    %v1930 = vmul.f32 %v1929, 0.6931472
    %v1931 = vlog2.pop %v1869
    %v1932 = vmul.f32 %v1931, 0.6931472
    %v1933 = vlog2.pop %v1870
    %v1934 = vmul.f32 %v1933, 0.6931472
    %v1935 = vadd.f32 %v1679, %v1872
    %v1936 = vadd.f32 %v1680, %v1874
    %v1937 = vadd.f32 %v1681, %v1876
    %v1938 = vadd.f32 %v1682, %v1878
    %v1939 = vadd.f32 %v1683, %v1880
    %v1940 = vadd.f32 %v1684, %v1882
    %v1941 = vadd.f32 %v1685, %v1884
    %v1942 = vadd.f32 %v1686, %v1886
    %v1943 = vadd.f32 %v1687, %v1888
    %v1944 = vadd.f32 %v1688, %v1890
    %v1945 = vadd.f32 %v1689, %v1892
    %v1946 = vadd.f32 %v1690, %v1894
    %v1947 = vadd.f32 %v1691, %v1896
    %v1948 = vadd.f32 %v1692, %v1898
    %v1949 = vadd.f32 %v1693, %v1900
    %v1950 = vadd.f32 %v1694, %v1902
    %v1951 = vadd.f32 %v1695, %v1904
    %v1952 = vadd.f32 %v1696, %v1906
    %v1953 = vadd.f32 %v1697, %v1908
    %v1954 = vadd.f32 %v1698, %v1910
    %v1955 = vadd.f32 %v1699, %v1912
    %v1956 = vadd.f32 %v1700, %v1914
    %v1957 = vadd.f32 %v1701, %v1916
    %v1958 = vadd.f32 %v1702, %v1918
    %v1959 = vadd.f32 %v1703, %v1920
    %v1960 = vadd.f32 %v1704, %v1922
    %v1961 = vadd.f32 %v1705, %v1924
    %v1962 = vadd.f32 %v1706, %v1926
    %v1963 = vadd.f32 %v1707, %v1928
    %v1964 = vadd.f32 %v1708, %v1930
    %v1965 = vadd.f32 %v1709, %v1932
    %v1966 = vadd.f32 %v1710, %v1934
    %v1967 = vadd.f32 %v1935, 1e-08
    %v1968 = vadd.f32 %v1936, 1e-08
    %v1969 = vadd.f32 %v1937, 1e-08
    %v1970 = vadd.f32 %v1938, 1e-08
    %v1971 = vadd.f32 %v1939, 1e-08
    %v1972 = vadd.f32 %v1940, 1e-08
    %v1973 = vadd.f32 %v1941, 1e-08
    %v1974 = vadd.f32 %v1942, 1e-08
    %v1975 = vadd.f32 %v1943, 1e-08
    %v1976 = vadd.f32 %v1944, 1e-08
    %v1977 = vadd.f32 %v1945, 1e-08
    %v1978 = vadd.f32 %v1946, 1e-08
    %v1979 = vadd.f32 %v1947, 1e-08
    %v1980 = vadd.f32 %v1948, 1e-08
    %v1981 = vadd.f32 %v1949, 1e-08
    %v1982 = vadd.f32 %v1950, 1e-08
    %v1983 = vadd.f32 %v1951, 1e-08
    %v1984 = vadd.f32 %v1952, 1e-08
    %v1985 = vadd.f32 %v1953, 1e-08
    %v1986 = vadd.f32 %v1954, 1e-08
    %v1987 = vadd.f32 %v1955, 1e-08
    %v1988 = vadd.f32 %v1956, 1e-08
    %v1989 = vadd.f32 %v1957, 1e-08
    %v1990 = vadd.f32 %v1958, 1e-08
    %v1991 = vadd.f32 %v1959, 1e-08
    %v1992 = vadd.f32 %v1960, 1e-08
    %v1993 = vadd.f32 %v1961, 1e-08
    %v1994 = vadd.f32 %v1962, 1e-08
    %v1995 = vadd.f32 %v1963, 1e-08
    %v1996 = vadd.f32 %v1964, 1e-08
    %v1997 = vadd.f32 %v1965, 1e-08
    %v1998 = vadd.f32 %v1966, 1e-08
    %vm1999 = vcmask 7168
    %v2000 = vsel %vm1999, %v1440, %v1967
    %v2001 = vsel %vm1999, %v1441, %v1968
    %v2002 = vsel %vm1999, %v1442, %v1969
    %v2003 = vsel %vm1999, %v1443, %v1970
    %v2004 = vsel %vm1999, %v1444, %v1971
    %v2005 = vsel %vm1999, %v1445, %v1972
    %v2006 = vsel %vm1999, %v1446, %v1973
    %v2007 = vsel %vm1999, %v1447, %v1974
    %v2008 = vsel %vm1999, %v1448, %v1975
    %v2009 = vsel %vm1999, %v1449, %v1976
    %v2010 = vsel %vm1999, %v1450, %v1977
    %v2011 = vsel %vm1999, %v1451, %v1978
    %v2012 = vsel %vm1999, %v1452, %v1979
    %v2013 = vsel %vm1999, %v1453, %v1980
    %v2014 = vsel %vm1999, %v1454, %v1981
    %v2015 = vsel %vm1999, %v1455, %v1982
    %v2016 = vsel %vm1999, %v1456, %v1983
    %v2017 = vsel %vm1999, %v1457, %v1984
    %v2018 = vsel %vm1999, %v1458, %v1985
    %v2019 = vsel %vm1999, %v1459, %v1986
    %v2020 = vsel %vm1999, %v1460, %v1987
    %v2021 = vsel %vm1999, %v1461, %v1988
    %v2022 = vsel %vm1999, %v1462, %v1989
    %v2023 = vsel %vm1999, %v1463, %v1990
    %v2024 = vsel %vm1999, %v1464, %v1991
    %v2025 = vsel %vm1999, %v1465, %v1992
    %v2026 = vsel %vm1999, %v1466, %v1993
    %v2027 = vsel %vm1999, %v1467, %v1994
    %v2028 = vsel %vm1999, %v1468, %v1995
    %v2029 = vsel %vm1999, %v1469, %v1996
    %v2030 = vsel %vm1999, %v1470, %v1997
    %v2031 = vsel %vm1999, %v1471, %v1998
    %vm2032 = vcmask 15360
    %2033 = vst.msk [vmem:[%s7] sm:$0xff] %vm2032, %v2000
    %2034 = vst.msk [vmem:[%s7 + $0x8] sm:$0xff] %vm2032, %v2001
    %2035 = vst.msk [vmem:[%s7 + $0x10] sm:$0xff] %vm2032, %v2002
    %2036 = vst.msk [vmem:[%s7 + $0x18] sm:$0xff] %vm2032, %v2003
    %2037 = vst.msk [vmem:[%s7 + $0x20] sm:$0xff] %vm2032, %v2004
    %2038 = vst.msk [vmem:[%s7 + $0x28] sm:$0xff] %vm2032, %v2005
    %2039 = vst.msk [vmem:[%s7 + $0x30] sm:$0xff] %vm2032, %v2006
    %2040 = vst.msk [vmem:[%s7 + $0x38] sm:$0xff] %vm2032, %v2007
    %2041 = vst.msk [vmem:[%s7 + $0x40] sm:$0xff] %vm2032, %v2008
    %2042 = vst.msk [vmem:[%s7 + $0x48] sm:$0xff] %vm2032, %v2009
    %2043 = vst.msk [vmem:[%s7 + $0x50] sm:$0xff] %vm2032, %v2010
    %2044 = vst.msk [vmem:[%s7 + $0x58] sm:$0xff] %vm2032, %v2011
    %2045 = vst.msk [vmem:[%s7 + $0x60] sm:$0xff] %vm2032, %v2012
    %2046 = vst.msk [vmem:[%s7 + $0x68] sm:$0xff] %vm2032, %v2013
    %2047 = vst.msk [vmem:[%s7 + $0x70] sm:$0xff] %vm2032, %v2014
    %2048 = vst.msk [vmem:[%s7 + $0x78] sm:$0xff] %vm2032, %v2015
    %2049 = vst.msk [vmem:[%s7 + $0x80] sm:$0xff] %vm2032, %v2016
    %2050 = vst.msk [vmem:[%s7 + $0x88] sm:$0xff] %vm2032, %v2017
    %2051 = vst.msk [vmem:[%s7 + $0x90] sm:$0xff] %vm2032, %v2018
    %2052 = vst.msk [vmem:[%s7 + $0x98] sm:$0xff] %vm2032, %v2019
    %2053 = vst.msk [vmem:[%s7 + $0xa0] sm:$0xff] %vm2032, %v2020
    %2054 = vst.msk [vmem:[%s7 + $0xa8] sm:$0xff] %vm2032, %v2021
    %2055 = vst.msk [vmem:[%s7 + $0xb0] sm:$0xff] %vm2032, %v2022
    %2056 = vst.msk [vmem:[%s7 + $0xb8] sm:$0xff] %vm2032, %v2023
    %2057 = vst.msk [vmem:[%s7 + $0xc0] sm:$0xff] %vm2032, %v2024
    %2058 = vst.msk [vmem:[%s7 + $0xc8] sm:$0xff] %vm2032, %v2025
    %2059 = vst.msk [vmem:[%s7 + $0xd0] sm:$0xff] %vm2032, %v2026
    %2060 = vst.msk [vmem:[%s7 + $0xd8] sm:$0xff] %vm2032, %v2027
    %2061 = vst.msk [vmem:[%s7 + $0xe0] sm:$0xff] %vm2032, %v2028
    %2062 = vst.msk [vmem:[%s7 + $0xe8] sm:$0xff] %vm2032, %v2029
    %2063 = vst.msk [vmem:[%s7 + $0xf0] sm:$0xff] %vm2032, %v2030
    %2064 = vst.msk [vmem:[%s7 + $0xf8] sm:$0xff] %vm2032, %v2031
    // Predicated region
    $region38: #{tpu_custom_call.1} parent=1 // pred_check
      _
    $region39: #{tpu_custom_call.1} parent=1 // pred_check_branch
      %2066 = sbr.rel (0) target = $region41
    $region40: #{tpu_custom_call.1} parent=1 // pred_region
      _
    $region41: #{tpu_custom_call.1} parent=1 // pred_fallthru
      _
    // Predicated region
    $region42: #{tpu_custom_call.1} parent=1 // pred_check
      _
    $region43: #{tpu_custom_call.1} parent=1 // pred_check_branch
      %2068 = sbr.rel (0) target = $region45
    $region44: #{tpu_custom_call.1} parent=1 // pred_region
      _
    $region45: #{tpu_custom_call.1} parent=1 // pred_fallthru
      _
    %2069 = vsyncpa [#allocation3], 1
    %2070 = vsyncpa [#allocation4], 1

</llo_original>
